<compile_context>
chip_gen: v6e
topology: v6e:2x2x1
jax: 0.10.0
libtpu: 0.0.40
codegen_flags: <defaults>
</compile_context>

<pallas_src>
import jax
import jax.numpy as jnp
from jax.experimental import pallas as pl
from jax.experimental.pallas import tpu as pltpu


def _lstm_dx_kernel(x_ref, t_ref,
                    wih_e_ref, whh_e_ref, b_e_ref,
                    wih_d_ref, whh_d_ref, b_d_ref,
                    w1_ref, b1_ref, w2_ref, b2_ref,
                    o_ref, y_ref):
    # x_ref: (T, B, L)   t_ref: (B, 1)
    # wih_e: (L, 4H)  whh_e: (H, 4H)  b_e: (1, 4H)   (encoder, pre-transposed, biases fused)
    # wih_d: (1, 4H)  whh_d: (H, 4H)  b_d: (1, 4H)   (decoder)
    # w1:    (2, H, H)  [0]=ctx half, [1]=dec-hidden half   b1: (1, H)
    # w2:    (H, 1)     b2: (1, 1)
    T, B, _ = x_ref.shape
    H = whh_e_ref.shape[0]

    wih_e = wih_e_ref[...]
    whh_e = whh_e_ref[...]
    b_e = b_e_ref[...]

    def lstm_cell(gates, c):
        # PyTorch gate order: i, f, g, o
        i = jax.nn.sigmoid(gates[:, 0 * H:1 * H])
        f = jax.nn.sigmoid(gates[:, 1 * H:2 * H])
        g = jnp.tanh(gates[:, 2 * H:3 * H])
        o = jax.nn.sigmoid(gates[:, 3 * H:4 * H])
        c_new = f * c + i * g
        h_new = o * jnp.tanh(c_new)
        return h_new, c_new

    h = jnp.zeros((B, H), jnp.float32)
    c = jnp.zeros((B, H), jnp.float32)

    # ---- encoder: T (=4) unrolled LSTM steps, gates fused into one 4H-wide matmul
    enc_hs = []
    for step in range(T):
        xt = x_ref[step]                                            # (B, L)
        gates = (jnp.dot(xt, wih_e, preferred_element_type=jnp.float32)
                 + jnp.dot(h, whh_e, preferred_element_type=jnp.float32)
                 + b_e)
        h, c = lstm_cell(gates, c)
        enc_hs.append(h)

    # ---- decoder: one LSTM step, scalar input -> outer product (no K=1 matmul)
    tval = t_ref[...]                                               # (B, 1)
    gates_d = (tval * wih_d_ref[...]
               + jnp.dot(h, whh_d_ref[...], preferred_element_type=jnp.float32)
               + b_d_ref[...])
    hd, _cd = lstm_cell(gates_d, c)                                 # (B, H)

    # ---- attention: scores over the T encoder steps, softmax over time
    scores = [jnp.sum(eh * hd, axis=-1, keepdims=True) for eh in enc_hs]
    s = jnp.concatenate(scores, axis=-1)                            # (B, T)
    s = s - jnp.max(s, axis=-1, keepdims=True)
    e = jnp.exp(s)
    att = e / jnp.sum(e, axis=-1, keepdims=True)                    # (B, T)

    ctx = jnp.zeros((B, H), jnp.float32)
    for step in range(T):
        ctx = ctx + att[:, step:step + 1] * enc_hs[step]            # (B, H)

    # ---- attention MLP: concat(ctx, hd) @ w1^T  ==  ctx @ w1[0] + hd @ w1[1]
    z = jnp.tanh(jnp.dot(ctx, w1_ref[0], preferred_element_type=jnp.float32)
                 + jnp.dot(hd, w1_ref[1], preferred_element_type=jnp.float32)
                 + b1_ref[...])                                     # (B, H)
    y = jnp.dot(z, w2_ref[...], preferred_element_type=jnp.float32) + b2_ref[...]   # (B, 1)
    y_ref[...] = y.astype(y_ref.dtype)

    # F.log_softmax over the size-1 last dim (dim=2 in torch layout) -> exactly 0
    m = jnp.max(y, axis=-1, keepdims=True)
    lse = m + jnp.log(jnp.sum(jnp.exp(y - m), axis=-1, keepdims=True))
    o_ref[...] = (y - lse).astype(o_ref.dtype)


def lstm_dx_forward(x, t, params):
    """x: (B, latent_dim, T)  t: (B,)  ->  (o: (B,1,1), y: (B,1) pre-logsoftmax logits)."""
    B, L, T = x.shape
    H = params["whh_e"].shape[1]
    G = 4 * H

    xs = jnp.transpose(x, (2, 0, 1)).astype(jnp.float32)            # (T, B, L)
    t_col = t.reshape(B, 1).astype(jnp.float32)

    # pre-transpose weights so every matmul output is (B, 4H) / (B, H): lane-dense
    wih_e = params["wih_e"].T                                       # (L, 4H)
    whh_e = params["whh_e"].T                                       # (H, 4H)
    b_e = (params["bih_e"] + params["bhh_e"]).reshape(1, G)
    wih_d = params["wih_d"].T                                       # (1, 4H)
    whh_d = params["whh_d"].T                                       # (H, 4H)
    b_d = (params["bih_d"] + params["bhh_d"]).reshape(1, G)
    w1s = params["w1"].T.reshape(2, H, H)                           # split: [ctx | dec_h]
    b1 = params["b1"].reshape(1, H)
    w2t = params["w2"].T                                            # (H, 1)
    b2 = params["b2"].reshape(1, 1)

    def full_spec(shape):
        nd = len(shape)
        return pl.BlockSpec(shape, lambda i, nd=nd: (0,) * nd)

    o, y = pl.pallas_call(
        _lstm_dx_kernel,
        out_shape=(jax.ShapeDtypeStruct((B, 1), jnp.float32),
                   jax.ShapeDtypeStruct((B, 1), jnp.float32)),
        grid_spec=pltpu.PrefetchScalarGridSpec(
            num_scalar_prefetch=0,
            grid=(1,),
            in_specs=[full_spec(xs.shape), full_spec(t_col.shape),
                      full_spec(wih_e.shape), full_spec(whh_e.shape), full_spec(b_e.shape),
                      full_spec(wih_d.shape), full_spec(whh_d.shape), full_spec(b_d.shape),
                      full_spec(w1s.shape), full_spec(b1.shape),
                      full_spec(w2t.shape), full_spec(b2.shape)],
            out_specs=(full_spec((B, 1)), full_spec((B, 1))),
        ),
        compiler_params=pltpu.CompilerParams(dimension_semantics=("arbitrary",)),
    )(xs, t_col, wih_e, whh_e, b_e, wih_d, whh_d, b_d, w1s, b1, w2t, b2)

    return o.reshape(B, 1, 1), y


# ---------------- pure-JAX reference (mirrors the PyTorch module) ----------------
def _reference(x, t, p):
    B = x.shape[0]
    H = p["whh_e"].shape[1]
    xs = jnp.transpose(x, (2, 0, 1)).astype(jnp.float32)            # (T, B, L)

    def cell(xt, h, c, wih, whh, bih, bhh):
        g = xt @ wih.T + bih + h @ whh.T + bhh
        i, f, gg, o = jnp.split(g, 4, axis=-1)
        i = jax.nn.sigmoid(i); f = jax.nn.sigmoid(f)
        gg = jnp.tanh(gg); o = jax.nn.sigmoid(o)
        c = f * c + i * gg
        h = o * jnp.tanh(c)
        return h, c

    h = jnp.zeros((B, H), jnp.float32)
    c = jnp.zeros((B, H), jnp.float32)
    enc = []
    for step in range(xs.shape[0]):
        h, c = cell(xs[step], h, c, p["wih_e"], p["whh_e"], p["bih_e"], p["bhh_e"])
        enc.append(h)
    enc_h = jnp.stack(enc, axis=1)                                  # (B, T, H)

    hd, _ = cell(t.reshape(B, 1).astype(jnp.float32), h, c,
                 p["wih_d"], p["whh_d"], p["bih_d"], p["bhh_d"])    # (B, H)

    score = jnp.einsum("bth,bh->bt", enc_h, hd)                     # (B, T)
    att = jax.nn.softmax(score, axis=1)                             # softmax over time (dim=1)
    ctx = jnp.einsum("bth,bt->bh", enc_h, att)                      # (B, H)

    ai = jnp.concatenate([ctx, hd], axis=-1)                        # (B, 2H)
    z = jnp.tanh(ai @ p["w1"].T + p["b1"])
    y = z @ p["w2"].T + p["b2"]                                     # (B, 1)
    o = jax.nn.log_softmax(y[:, None, :], axis=2)                   # (B, 1, 1) == zeros
    return o, y


def init_params(key, latent_dim, hidden_dim):
    H = hidden_dim
    ks = jax.random.split(key, 12)
    bd_lstm = 1.0 / (H ** 0.5)                 # torch nn.LSTM default init bound
    bd_w1 = 1.0 / ((2 * H) ** 0.5)             # torch nn.Linear default init bounds
    bd_w2 = 1.0 / (H ** 0.5)
    u = lambda k, shape, b: jax.random.uniform(k, shape, jnp.float32, -b, b)
    return dict(
        wih_e=u(ks[0], (4 * H, latent_dim), bd_lstm),
        whh_e=u(ks[1], (4 * H, H), bd_lstm),
        bih_e=u(ks[2], (4 * H,), bd_lstm),
        bhh_e=u(ks[3], (4 * H,), bd_lstm),
        wih_d=u(ks[4], (4 * H, 1), bd_lstm),
        whh_d=u(ks[5], (4 * H, H), bd_lstm),
        bih_d=u(ks[6], (4 * H,), bd_lstm),
        bhh_d=u(ks[7], (4 * H,), bd_lstm),
        w1=u(ks[8], (H, 2 * H), bd_w1),
        b1=u(ks[9], (H,), bd_w1),
        w2=u(ks[10], (1, H), bd_w2),
        b2=u(ks[11], (1,), bd_w2),
    )


if __name__ == "__main__":
    # lstm_dX(batch_size=4, hidden_dim=32, latent_dim=100); x: (n, 100, 4) per the docstring
    B, latent_dim, T, H = 4, 100, 4, 32

    key = jax.random.PRNGKey(0)
    kx, kt, kp = jax.random.split(key, 3)
    x = jax.random.normal(kx, (B, latent_dim, T), dtype=jnp.float32)
    t = jax.random.normal(kt, (B,), dtype=jnp.float32)
    params = init_params(kp, latent_dim, H)

    o, y = lstm_dx_forward(x, t, params)
    o = jax.block_until_ready(o)

    o_ref, y_ref = _reference(x, t, params)
    assert o.shape == (B, 1, 1)
    assert jnp.max(jnp.abs(y - y_ref)) < 1e-3, "pre-logsoftmax logits mismatch vs reference"
    assert jnp.max(jnp.abs(o - o_ref)) < 1e-5, "module output mismatch vs reference"

    print("KERNEL_OK")
</pallas_src>

<mosaic_0001>
module attributes {stable_mosaic.version = 11 : i64} {
  func.func @_lstm_dx_kernel(%arg0: i32, %arg1: memref<4x4x100xf32, #tpu.memory_space<vmem>>, %arg2: memref<4x1xf32, #tpu.memory_space<vmem>>, %arg3: memref<100x128xf32, #tpu.memory_space<vmem>>, %arg4: memref<32x128xf32, #tpu.memory_space<vmem>>, %arg5: memref<1x128xf32, #tpu.memory_space<vmem>>, %arg6: memref<1x128xf32, #tpu.memory_space<vmem>>, %arg7: memref<32x128xf32, #tpu.memory_space<vmem>>, %arg8: memref<1x128xf32, #tpu.memory_space<vmem>>, %arg9: memref<2x32x32xf32, #tpu.memory_space<vmem>>, %arg10: memref<1x32xf32, #tpu.memory_space<vmem>>, %arg11: memref<32x1xf32, #tpu.memory_space<vmem>>, %arg12: memref<1x1xf32, #tpu.memory_space<vmem>>, %arg13: memref<4x1xf32, #tpu.memory_space<vmem>>, %arg14: memref<4x1xf32, #tpu.memory_space<vmem>>) attributes {dimension_semantics = [#tpu.dimension_semantics<arbitrary>], iteration_bounds = array<i64: 1>, scalar_prefetch = 0 : i64, scratch_operands = 0 : i64, tpu.core_type = #tpu.core_type<tc>, window_params = [{pipeline_mode = #tpu.pipeline_mode<synchronous>, transform_indices = @transform_0, window_bounds = array<i64: 4, 4, 100>}, {pipeline_mode = #tpu.pipeline_mode<synchronous>, transform_indices = @transform_1, window_bounds = array<i64: 4, 1>}, {pipeline_mode = #tpu.pipeline_mode<synchronous>, transform_indices = @transform_2, window_bounds = array<i64: 100, 128>}, {pipeline_mode = #tpu.pipeline_mode<synchronous>, transform_indices = @transform_3, window_bounds = array<i64: 32, 128>}, {pipeline_mode = #tpu.pipeline_mode<synchronous>, transform_indices = @transform_4, window_bounds = array<i64: 1, 128>}, {pipeline_mode = #tpu.pipeline_mode<synchronous>, transform_indices = @transform_5, window_bounds = array<i64: 1, 128>}, {pipeline_mode = #tpu.pipeline_mode<synchronous>, transform_indices = @transform_6, window_bounds = array<i64: 32, 128>}, {pipeline_mode = #tpu.pipeline_mode<synchronous>, transform_indices = @transform_7, window_bounds = array<i64: 1, 128>}, {pipeline_mode = #tpu.pipeline_mode<synchronous>, transform_indices = @transform_8, window_bounds = array<i64: 2, 32, 32>}, {pipeline_mode = #tpu.pipeline_mode<synchronous>, transform_indices = @transform_9, window_bounds = array<i64: 1, 32>}, {pipeline_mode = #tpu.pipeline_mode<synchronous>, transform_indices = @transform_10, window_bounds = array<i64: 32, 1>}, {pipeline_mode = #tpu.pipeline_mode<synchronous>, transform_indices = @transform_11, window_bounds = array<i64: 1, 1>}, {pipeline_mode = #tpu.pipeline_mode<synchronous>, transform_indices = @transform_12, window_bounds = array<i64: 4, 1>}, {pipeline_mode = #tpu.pipeline_mode<synchronous>, transform_indices = @transform_13, window_bounds = array<i64: 4, 1>}]} {
    %c0 = arith.constant 0 : index
    %c0_0 = arith.constant 0 : index
    %0 = vector.load %arg3[%c0, %c0_0] : memref<100x128xf32, #tpu.memory_space<vmem>>, vector<100x128xf32>
    %c0_1 = arith.constant 0 : index
    %c0_2 = arith.constant 0 : index
    %1 = vector.load %arg4[%c0_1, %c0_2] : memref<32x128xf32, #tpu.memory_space<vmem>>, vector<32x128xf32>
    %c0_3 = arith.constant 0 : index
    %c0_4 = arith.constant 0 : index
    %2 = vector.load %arg5[%c0_3, %c0_4] : memref<1x128xf32, #tpu.memory_space<vmem>>, vector<1x128xf32>
    %cst = arith.constant 0.000000e+00 : f32
    %3 = vector.broadcast %cst : f32 to vector<4x32xf32>
    %cst_5 = arith.constant 0.000000e+00 : f32
    %4 = vector.broadcast %cst_5 : f32 to vector<4x32xf32>
    %c0_6 = arith.constant 0 : index
    %c0_7 = arith.constant 0 : index
    %c0_8 = arith.constant 0 : index
    %5 = vector.load %arg1[%c0_6, %c0_7, %c0_8] : memref<4x4x100xf32, #tpu.memory_space<vmem>>, vector<1x4x100xf32>
    %6 = vector.shape_cast %5 : vector<1x4x100xf32> to vector<4x100xf32>
    %cst_9 = arith.constant dense<0.000000e+00> : vector<4x128xf32>
    %7 = tpu.matmul %6, %0, %cst_9 {dimension_numbers = #tpu.dot_dimension_numbers<[1], [0], [0], [1], [0, 0, 1, 1], [], []>} : vector<4x100xf32>, vector<100x128xf32>, vector<4x128xf32> -> vector<4x128xf32>
    %cst_10 = arith.constant dense<0.000000e+00> : vector<4x128xf32>
    %8 = tpu.matmul %3, %1, %cst_10 {dimension_numbers = #tpu.dot_dimension_numbers<[1], [0], [0], [1], [0, 0, 1, 1], [], []>} : vector<4x32xf32>, vector<32x128xf32>, vector<4x128xf32> -> vector<4x128xf32>
    %9 = arith.addf %7, %8 : vector<4x128xf32>
    %10 = vector.broadcast %2 : vector<1x128xf32> to vector<4x128xf32>
    %11 = arith.addf %9, %10 : vector<4x128xf32>
    %12 = vector.extract_strided_slice %11 {offsets = [0, 0], sizes = [4, 32], strides = [1, 1]} : vector<4x128xf32> to vector<4x32xf32>
    %13 = arith.negf %12 : vector<4x32xf32>
    %14 = math.exp %13 : vector<4x32xf32>
    %cst_11 = arith.constant 1.000000e+00 : f32
    %15 = vector.broadcast %cst_11 : f32 to vector<4x32xf32>
    %16 = arith.addf %15, %14 : vector<4x32xf32>
    %17 = arith.divf %15, %16 : vector<4x32xf32>
    %18 = vector.extract_strided_slice %11 {offsets = [0, 32], sizes = [4, 32], strides = [1, 1]} : vector<4x128xf32> to vector<4x32xf32>
    %19 = arith.negf %18 : vector<4x32xf32>
    %20 = math.exp %19 : vector<4x32xf32>
    %cst_12 = arith.constant 1.000000e+00 : f32
    %21 = vector.broadcast %cst_12 : f32 to vector<4x32xf32>
    %22 = arith.addf %21, %20 : vector<4x32xf32>
    %23 = arith.divf %21, %22 : vector<4x32xf32>
    %24 = vector.extract_strided_slice %11 {offsets = [0, 64], sizes = [4, 32], strides = [1, 1]} : vector<4x128xf32> to vector<4x32xf32>
    %25 = math.tanh %24 : vector<4x32xf32>
    %26 = vector.extract_strided_slice %11 {offsets = [0, 96], sizes = [4, 32], strides = [1, 1]} : vector<4x128xf32> to vector<4x32xf32>
    %27 = arith.negf %26 : vector<4x32xf32>
    %28 = math.exp %27 : vector<4x32xf32>
    %cst_13 = arith.constant 1.000000e+00 : f32
    %29 = vector.broadcast %cst_13 : f32 to vector<4x32xf32>
    %30 = arith.addf %29, %28 : vector<4x32xf32>
    %31 = arith.divf %29, %30 : vector<4x32xf32>
    %32 = arith.mulf %23, %4 : vector<4x32xf32>
    %33 = arith.mulf %17, %25 : vector<4x32xf32>
    %34 = arith.addf %32, %33 : vector<4x32xf32>
    %35 = math.tanh %34 : vector<4x32xf32>
    %36 = arith.mulf %31, %35 : vector<4x32xf32>
    %c1 = arith.constant 1 : index
    %c0_14 = arith.constant 0 : index
    %c0_15 = arith.constant 0 : index
    %37 = vector.load %arg1[%c1, %c0_14, %c0_15] : memref<4x4x100xf32, #tpu.memory_space<vmem>>, vector<1x4x100xf32>
    %38 = vector.shape_cast %37 : vector<1x4x100xf32> to vector<4x100xf32>
    %cst_16 = arith.constant dense<0.000000e+00> : vector<4x128xf32>
    %39 = tpu.matmul %38, %0, %cst_16 {dimension_numbers = #tpu.dot_dimension_numbers<[1], [0], [0], [1], [0, 0, 1, 1], [], []>} : vector<4x100xf32>, vector<100x128xf32>, vector<4x128xf32> -> vector<4x128xf32>
    %cst_17 = arith.constant dense<0.000000e+00> : vector<4x128xf32>
    %40 = tpu.matmul %36, %1, %cst_17 {dimension_numbers = #tpu.dot_dimension_numbers<[1], [0], [0], [1], [0, 0, 1, 1], [], []>} : vector<4x32xf32>, vector<32x128xf32>, vector<4x128xf32> -> vector<4x128xf32>
    %41 = arith.addf %39, %40 : vector<4x128xf32>
    %42 = vector.broadcast %2 : vector<1x128xf32> to vector<4x128xf32>
    %43 = arith.addf %41, %42 : vector<4x128xf32>
    %44 = vector.extract_strided_slice %43 {offsets = [0, 0], sizes = [4, 32], strides = [1, 1]} : vector<4x128xf32> to vector<4x32xf32>
    %45 = arith.negf %44 : vector<4x32xf32>
    %46 = math.exp %45 : vector<4x32xf32>
    %cst_18 = arith.constant 1.000000e+00 : f32
    %47 = vector.broadcast %cst_18 : f32 to vector<4x32xf32>
    %48 = arith.addf %47, %46 : vector<4x32xf32>
    %49 = arith.divf %47, %48 : vector<4x32xf32>
    %50 = vector.extract_strided_slice %43 {offsets = [0, 32], sizes = [4, 32], strides = [1, 1]} : vector<4x128xf32> to vector<4x32xf32>
    %51 = arith.negf %50 : vector<4x32xf32>
    %52 = math.exp %51 : vector<4x32xf32>
    %cst_19 = arith.constant 1.000000e+00 : f32
    %53 = vector.broadcast %cst_19 : f32 to vector<4x32xf32>
    %54 = arith.addf %53, %52 : vector<4x32xf32>
    %55 = arith.divf %53, %54 : vector<4x32xf32>
    %56 = vector.extract_strided_slice %43 {offsets = [0, 64], sizes = [4, 32], strides = [1, 1]} : vector<4x128xf32> to vector<4x32xf32>
    %57 = math.tanh %56 : vector<4x32xf32>
    %58 = vector.extract_strided_slice %43 {offsets = [0, 96], sizes = [4, 32], strides = [1, 1]} : vector<4x128xf32> to vector<4x32xf32>
    %59 = arith.negf %58 : vector<4x32xf32>
    %60 = math.exp %59 : vector<4x32xf32>
    %cst_20 = arith.constant 1.000000e+00 : f32
    %61 = vector.broadcast %cst_20 : f32 to vector<4x32xf32>
    %62 = arith.addf %61, %60 : vector<4x32xf32>
    %63 = arith.divf %61, %62 : vector<4x32xf32>
    %64 = arith.mulf %55, %34 : vector<4x32xf32>
    %65 = arith.mulf %49, %57 : vector<4x32xf32>
    %66 = arith.addf %64, %65 : vector<4x32xf32>
    %67 = math.tanh %66 : vector<4x32xf32>
    %68 = arith.mulf %63, %67 : vector<4x32xf32>
    %c2 = arith.constant 2 : index
    %c0_21 = arith.constant 0 : index
    %c0_22 = arith.constant 0 : index
    %69 = vector.load %arg1[%c2, %c0_21, %c0_22] : memref<4x4x100xf32, #tpu.memory_space<vmem>>, vector<1x4x100xf32>
    %70 = vector.shape_cast %69 : vector<1x4x100xf32> to vector<4x100xf32>
    %cst_23 = arith.constant dense<0.000000e+00> : vector<4x128xf32>
    %71 = tpu.matmul %70, %0, %cst_23 {dimension_numbers = #tpu.dot_dimension_numbers<[1], [0], [0], [1], [0, 0, 1, 1], [], []>} : vector<4x100xf32>, vector<100x128xf32>, vector<4x128xf32> -> vector<4x128xf32>
    %cst_24 = arith.constant dense<0.000000e+00> : vector<4x128xf32>
    %72 = tpu.matmul %68, %1, %cst_24 {dimension_numbers = #tpu.dot_dimension_numbers<[1], [0], [0], [1], [0, 0, 1, 1], [], []>} : vector<4x32xf32>, vector<32x128xf32>, vector<4x128xf32> -> vector<4x128xf32>
    %73 = arith.addf %71, %72 : vector<4x128xf32>
    %74 = vector.broadcast %2 : vector<1x128xf32> to vector<4x128xf32>
    %75 = arith.addf %73, %74 : vector<4x128xf32>
    %76 = vector.extract_strided_slice %75 {offsets = [0, 0], sizes = [4, 32], strides = [1, 1]} : vector<4x128xf32> to vector<4x32xf32>
    %77 = arith.negf %76 : vector<4x32xf32>
    %78 = math.exp %77 : vector<4x32xf32>
    %cst_25 = arith.constant 1.000000e+00 : f32
    %79 = vector.broadcast %cst_25 : f32 to vector<4x32xf32>
    %80 = arith.addf %79, %78 : vector<4x32xf32>
    %81 = arith.divf %79, %80 : vector<4x32xf32>
    %82 = vector.extract_strided_slice %75 {offsets = [0, 32], sizes = [4, 32], strides = [1, 1]} : vector<4x128xf32> to vector<4x32xf32>
    %83 = arith.negf %82 : vector<4x32xf32>
    %84 = math.exp %83 : vector<4x32xf32>
    %cst_26 = arith.constant 1.000000e+00 : f32
    %85 = vector.broadcast %cst_26 : f32 to vector<4x32xf32>
    %86 = arith.addf %85, %84 : vector<4x32xf32>
    %87 = arith.divf %85, %86 : vector<4x32xf32>
    %88 = vector.extract_strided_slice %75 {offsets = [0, 64], sizes = [4, 32], strides = [1, 1]} : vector<4x128xf32> to vector<4x32xf32>
    %89 = math.tanh %88 : vector<4x32xf32>
    %90 = vector.extract_strided_slice %75 {offsets = [0, 96], sizes = [4, 32], strides = [1, 1]} : vector<4x128xf32> to vector<4x32xf32>
    %91 = arith.negf %90 : vector<4x32xf32>
    %92 = math.exp %91 : vector<4x32xf32>
    %cst_27 = arith.constant 1.000000e+00 : f32
    %93 = vector.broadcast %cst_27 : f32 to vector<4x32xf32>
    %94 = arith.addf %93, %92 : vector<4x32xf32>
    %95 = arith.divf %93, %94 : vector<4x32xf32>
    %96 = arith.mulf %87, %66 : vector<4x32xf32>
    %97 = arith.mulf %81, %89 : vector<4x32xf32>
    %98 = arith.addf %96, %97 : vector<4x32xf32>
    %99 = math.tanh %98 : vector<4x32xf32>
    %100 = arith.mulf %95, %99 : vector<4x32xf32>
    %c3 = arith.constant 3 : index
    %c0_28 = arith.constant 0 : index
    %c0_29 = arith.constant 0 : index
    %101 = vector.load %arg1[%c3, %c0_28, %c0_29] : memref<4x4x100xf32, #tpu.memory_space<vmem>>, vector<1x4x100xf32>
    %102 = vector.shape_cast %101 : vector<1x4x100xf32> to vector<4x100xf32>
    %cst_30 = arith.constant dense<0.000000e+00> : vector<4x128xf32>
    %103 = tpu.matmul %102, %0, %cst_30 {dimension_numbers = #tpu.dot_dimension_numbers<[1], [0], [0], [1], [0, 0, 1, 1], [], []>} : vector<4x100xf32>, vector<100x128xf32>, vector<4x128xf32> -> vector<4x128xf32>
    %cst_31 = arith.constant dense<0.000000e+00> : vector<4x128xf32>
    %104 = tpu.matmul %100, %1, %cst_31 {dimension_numbers = #tpu.dot_dimension_numbers<[1], [0], [0], [1], [0, 0, 1, 1], [], []>} : vector<4x32xf32>, vector<32x128xf32>, vector<4x128xf32> -> vector<4x128xf32>
    %105 = arith.addf %103, %104 : vector<4x128xf32>
    %106 = vector.broadcast %2 : vector<1x128xf32> to vector<4x128xf32>
    %107 = arith.addf %105, %106 : vector<4x128xf32>
    %108 = vector.extract_strided_slice %107 {offsets = [0, 0], sizes = [4, 32], strides = [1, 1]} : vector<4x128xf32> to vector<4x32xf32>
    %109 = arith.negf %108 : vector<4x32xf32>
    %110 = math.exp %109 : vector<4x32xf32>
    %cst_32 = arith.constant 1.000000e+00 : f32
    %111 = vector.broadcast %cst_32 : f32 to vector<4x32xf32>
    %112 = arith.addf %111, %110 : vector<4x32xf32>
    %113 = arith.divf %111, %112 : vector<4x32xf32>
    %114 = vector.extract_strided_slice %107 {offsets = [0, 32], sizes = [4, 32], strides = [1, 1]} : vector<4x128xf32> to vector<4x32xf32>
    %115 = arith.negf %114 : vector<4x32xf32>
    %116 = math.exp %115 : vector<4x32xf32>
    %cst_33 = arith.constant 1.000000e+00 : f32
    %117 = vector.broadcast %cst_33 : f32 to vector<4x32xf32>
    %118 = arith.addf %117, %116 : vector<4x32xf32>
    %119 = arith.divf %117, %118 : vector<4x32xf32>
    %120 = vector.extract_strided_slice %107 {offsets = [0, 64], sizes = [4, 32], strides = [1, 1]} : vector<4x128xf32> to vector<4x32xf32>
    %121 = math.tanh %120 : vector<4x32xf32>
    %122 = vector.extract_strided_slice %107 {offsets = [0, 96], sizes = [4, 32], strides = [1, 1]} : vector<4x128xf32> to vector<4x32xf32>
    %123 = arith.negf %122 : vector<4x32xf32>
    %124 = math.exp %123 : vector<4x32xf32>
    %cst_34 = arith.constant 1.000000e+00 : f32
    %125 = vector.broadcast %cst_34 : f32 to vector<4x32xf32>
    %126 = arith.addf %125, %124 : vector<4x32xf32>
    %127 = arith.divf %125, %126 : vector<4x32xf32>
    %128 = arith.mulf %119, %98 : vector<4x32xf32>
    %129 = arith.mulf %113, %121 : vector<4x32xf32>
    %130 = arith.addf %128, %129 : vector<4x32xf32>
    %131 = math.tanh %130 : vector<4x32xf32>
    %132 = arith.mulf %127, %131 : vector<4x32xf32>
    %c0_35 = arith.constant 0 : index
    %c0_36 = arith.constant 0 : index
    %133 = vector.load %arg2[%c0_35, %c0_36] : memref<4x1xf32, #tpu.memory_space<vmem>>, vector<4x1xf32>
    %c0_37 = arith.constant 0 : index
    %c0_38 = arith.constant 0 : index
    %134 = vector.load %arg6[%c0_37, %c0_38] : memref<1x128xf32, #tpu.memory_space<vmem>>, vector<1x128xf32>
    %135 = vector.broadcast %133 : vector<4x1xf32> to vector<4x128xf32>
    %136 = vector.broadcast %134 : vector<1x128xf32> to vector<4x128xf32>
    %137 = arith.mulf %135, %136 : vector<4x128xf32>
    %c0_39 = arith.constant 0 : index
    %c0_40 = arith.constant 0 : index
    %138 = vector.load %arg7[%c0_39, %c0_40] : memref<32x128xf32, #tpu.memory_space<vmem>>, vector<32x128xf32>
    %cst_41 = arith.constant dense<0.000000e+00> : vector<4x128xf32>
    %139 = tpu.matmul %132, %138, %cst_41 {dimension_numbers = #tpu.dot_dimension_numbers<[1], [0], [0], [1], [0, 0, 1, 1], [], []>} : vector<4x32xf32>, vector<32x128xf32>, vector<4x128xf32> -> vector<4x128xf32>
    %140 = arith.addf %137, %139 : vector<4x128xf32>
    %c0_42 = arith.constant 0 : index
    %c0_43 = arith.constant 0 : index
    %141 = vector.load %arg8[%c0_42, %c0_43] : memref<1x128xf32, #tpu.memory_space<vmem>>, vector<1x128xf32>
    %142 = vector.broadcast %141 : vector<1x128xf32> to vector<4x128xf32>
    %143 = arith.addf %140, %142 : vector<4x128xf32>
    %144 = vector.extract_strided_slice %143 {offsets = [0, 0], sizes = [4, 32], strides = [1, 1]} : vector<4x128xf32> to vector<4x32xf32>
    %145 = arith.negf %144 : vector<4x32xf32>
    %146 = math.exp %145 : vector<4x32xf32>
    %cst_44 = arith.constant 1.000000e+00 : f32
    %147 = vector.broadcast %cst_44 : f32 to vector<4x32xf32>
    %148 = arith.addf %147, %146 : vector<4x32xf32>
    %149 = arith.divf %147, %148 : vector<4x32xf32>
    %150 = vector.extract_strided_slice %143 {offsets = [0, 32], sizes = [4, 32], strides = [1, 1]} : vector<4x128xf32> to vector<4x32xf32>
    %151 = arith.negf %150 : vector<4x32xf32>
    %152 = math.exp %151 : vector<4x32xf32>
    %cst_45 = arith.constant 1.000000e+00 : f32
    %153 = vector.broadcast %cst_45 : f32 to vector<4x32xf32>
    %154 = arith.addf %153, %152 : vector<4x32xf32>
    %155 = arith.divf %153, %154 : vector<4x32xf32>
    %156 = vector.extract_strided_slice %143 {offsets = [0, 64], sizes = [4, 32], strides = [1, 1]} : vector<4x128xf32> to vector<4x32xf32>
    %157 = math.tanh %156 : vector<4x32xf32>
    %158 = vector.extract_strided_slice %143 {offsets = [0, 96], sizes = [4, 32], strides = [1, 1]} : vector<4x128xf32> to vector<4x32xf32>
    %159 = arith.negf %158 : vector<4x32xf32>
    %160 = math.exp %159 : vector<4x32xf32>
    %cst_46 = arith.constant 1.000000e+00 : f32
    %161 = vector.broadcast %cst_46 : f32 to vector<4x32xf32>
    %162 = arith.addf %161, %160 : vector<4x32xf32>
    %163 = arith.divf %161, %162 : vector<4x32xf32>
    %164 = arith.mulf %155, %130 : vector<4x32xf32>
    %165 = arith.mulf %149, %157 : vector<4x32xf32>
    %166 = arith.addf %164, %165 : vector<4x32xf32>
    %167 = math.tanh %166 : vector<4x32xf32>
    %168 = arith.mulf %163, %167 : vector<4x32xf32>
    %169 = arith.mulf %36, %168 : vector<4x32xf32>
    %cst_47 = arith.constant dense<0.000000e+00> : vector<4xf32>
    %170 = vector.multi_reduction <add>, %169, %cst_47 [1] : vector<4x32xf32> to vector<4xf32>
    %171 = vector.shape_cast %170 : vector<4xf32> to vector<4x1xf32>
    %172 = arith.mulf %68, %168 : vector<4x32xf32>
    %cst_48 = arith.constant dense<0.000000e+00> : vector<4xf32>
    %173 = vector.multi_reduction <add>, %172, %cst_48 [1] : vector<4x32xf32> to vector<4xf32>
    %174 = vector.shape_cast %173 : vector<4xf32> to vector<4x1xf32>
    %175 = arith.mulf %100, %168 : vector<4x32xf32>
    %cst_49 = arith.constant dense<0.000000e+00> : vector<4xf32>
    %176 = vector.multi_reduction <add>, %175, %cst_49 [1] : vector<4x32xf32> to vector<4xf32>
    %177 = vector.shape_cast %176 : vector<4xf32> to vector<4x1xf32>
    %178 = arith.mulf %132, %168 : vector<4x32xf32>
    %cst_50 = arith.constant dense<0.000000e+00> : vector<4xf32>
    %179 = vector.multi_reduction <add>, %178, %cst_50 [1] : vector<4x32xf32> to vector<4xf32>
    %180 = vector.shape_cast %179 : vector<4xf32> to vector<4x1xf32>
    %181 = tpu.concatenate %171, %174, %177, %180 in 1 : vector<4x1xf32>, vector<4x1xf32>, vector<4x1xf32>, vector<4x1xf32> -> vector<4x4xf32>
    %cst_51 = arith.constant dense<0xFF800000> : vector<4xf32>
    %182 = vector.multi_reduction <maximumf>, %181, %cst_51 [1] : vector<4x4xf32> to vector<4xf32>
    %183 = vector.shape_cast %182 : vector<4xf32> to vector<4x1xf32>
    %184 = vector.broadcast %183 : vector<4x1xf32> to vector<4x4xf32>
    %185 = arith.subf %181, %184 : vector<4x4xf32>
    %186 = math.exp %185 : vector<4x4xf32>
    %cst_52 = arith.constant dense<0.000000e+00> : vector<4xf32>
    %187 = vector.multi_reduction <add>, %186, %cst_52 [1] : vector<4x4xf32> to vector<4xf32>
    %188 = vector.shape_cast %187 : vector<4xf32> to vector<4x1xf32>
    %189 = vector.broadcast %188 : vector<4x1xf32> to vector<4x4xf32>
    %190 = arith.divf %186, %189 : vector<4x4xf32>
    %cst_53 = arith.constant 0.000000e+00 : f32
    %191 = vector.broadcast %cst_53 : f32 to vector<4x32xf32>
    %192 = vector.extract_strided_slice %190 {offsets = [0, 0], sizes = [4, 1], strides = [1, 1]} : vector<4x4xf32> to vector<4x1xf32>
    %193 = vector.broadcast %192 : vector<4x1xf32> to vector<4x32xf32>
    %194 = arith.mulf %193, %36 : vector<4x32xf32>
    %195 = arith.addf %191, %194 : vector<4x32xf32>
    %196 = vector.extract_strided_slice %190 {offsets = [0, 1], sizes = [4, 1], strides = [1, 1]} : vector<4x4xf32> to vector<4x1xf32>
    %197 = vector.broadcast %196 : vector<4x1xf32> to vector<4x32xf32>
    %198 = arith.mulf %197, %68 : vector<4x32xf32>
    %199 = arith.addf %195, %198 : vector<4x32xf32>
    %200 = vector.extract_strided_slice %190 {offsets = [0, 2], sizes = [4, 1], strides = [1, 1]} : vector<4x4xf32> to vector<4x1xf32>
    %201 = vector.broadcast %200 : vector<4x1xf32> to vector<4x32xf32>
    %202 = arith.mulf %201, %100 : vector<4x32xf32>
    %203 = arith.addf %199, %202 : vector<4x32xf32>
    %204 = vector.extract_strided_slice %190 {offsets = [0, 3], sizes = [4, 1], strides = [1, 1]} : vector<4x4xf32> to vector<4x1xf32>
    %205 = vector.broadcast %204 : vector<4x1xf32> to vector<4x32xf32>
    %206 = arith.mulf %205, %132 : vector<4x32xf32>
    %207 = arith.addf %203, %206 : vector<4x32xf32>
    %c0_54 = arith.constant 0 : index
    %c0_55 = arith.constant 0 : index
    %c0_56 = arith.constant 0 : index
    %208 = vector.load %arg9[%c0_54, %c0_55, %c0_56] : memref<2x32x32xf32, #tpu.memory_space<vmem>>, vector<1x32x32xf32>
    %209 = vector.shape_cast %208 : vector<1x32x32xf32> to vector<32x32xf32>
    %cst_57 = arith.constant dense<0.000000e+00> : vector<4x32xf32>
    %210 = tpu.matmul %207, %209, %cst_57 {dimension_numbers = #tpu.dot_dimension_numbers<[1], [0], [0], [1], [0, 0, 1, 1], [], []>} : vector<4x32xf32>, vector<32x32xf32>, vector<4x32xf32> -> vector<4x32xf32>
    %c1_58 = arith.constant 1 : index
    %c0_59 = arith.constant 0 : index
    %c0_60 = arith.constant 0 : index
    %211 = vector.load %arg9[%c1_58, %c0_59, %c0_60] : memref<2x32x32xf32, #tpu.memory_space<vmem>>, vector<1x32x32xf32>
    %212 = vector.shape_cast %211 : vector<1x32x32xf32> to vector<32x32xf32>
    %cst_61 = arith.constant dense<0.000000e+00> : vector<4x32xf32>
    %213 = tpu.matmul %168, %212, %cst_61 {dimension_numbers = #tpu.dot_dimension_numbers<[1], [0], [0], [1], [0, 0, 1, 1], [], []>} : vector<4x32xf32>, vector<32x32xf32>, vector<4x32xf32> -> vector<4x32xf32>
    %214 = arith.addf %210, %213 : vector<4x32xf32>
    %c0_62 = arith.constant 0 : index
    %c0_63 = arith.constant 0 : index
    %215 = vector.load %arg10[%c0_62, %c0_63] : memref<1x32xf32, #tpu.memory_space<vmem>>, vector<1x32xf32>
    %216 = vector.broadcast %215 : vector<1x32xf32> to vector<4x32xf32>
    %217 = arith.addf %214, %216 : vector<4x32xf32>
    %218 = math.tanh %217 : vector<4x32xf32>
    %c0_64 = arith.constant 0 : index
    %c0_65 = arith.constant 0 : index
    %219 = vector.load %arg11[%c0_64, %c0_65] : memref<32x1xf32, #tpu.memory_space<vmem>>, vector<32x1xf32>
    %cst_66 = arith.constant dense<0.000000e+00> : vector<4x1xf32>
    %220 = tpu.matmul %218, %219, %cst_66 {dimension_numbers = #tpu.dot_dimension_numbers<[1], [0], [0], [1], [0, 0, 1, 1], [], []>} : vector<4x32xf32>, vector<32x1xf32>, vector<4x1xf32> -> vector<4x1xf32>
    %c0_67 = arith.constant 0 : index
    %c0_68 = arith.constant 0 : index
    %221 = vector.load %arg12[%c0_67, %c0_68] : memref<1x1xf32, #tpu.memory_space<vmem>>, vector<1x1xf32>
    %222 = vector.broadcast %221 : vector<1x1xf32> to vector<4x1xf32>
    %223 = arith.addf %220, %222 : vector<4x1xf32>
    %c0_69 = arith.constant 0 : index
    %c0_70 = arith.constant 0 : index
    %224 = vector.load %arg14[%c0_69, %c0_70] : memref<4x1xf32, #tpu.memory_space<vmem>>, vector<4x1xf32>
    tpu.vector_store %arg14[%c0_69, %c0_70], %223 {strides = array<i32>} : memref<4x1xf32, #tpu.memory_space<vmem>>, vector<4x1xf32>,
    %cst_71 = arith.constant dense<0xFF800000> : vector<4xf32>
    %225 = vector.multi_reduction <maximumf>, %223, %cst_71 [1] : vector<4x1xf32> to vector<4xf32>
    %226 = vector.shape_cast %225 : vector<4xf32> to vector<4x1xf32>
    %227 = arith.subf %223, %226 : vector<4x1xf32>
    %228 = math.exp %227 : vector<4x1xf32>
    %cst_72 = arith.constant dense<0.000000e+00> : vector<4xf32>
    %229 = vector.multi_reduction <add>, %228, %cst_72 [1] : vector<4x1xf32> to vector<4xf32>
    %230 = vector.shape_cast %229 : vector<4xf32> to vector<4x1xf32>
    %231 = math.log %230 : vector<4x1xf32>
    %232 = arith.addf %226, %231 : vector<4x1xf32>
    %233 = arith.subf %223, %232 : vector<4x1xf32>
    %c0_73 = arith.constant 0 : index
    %c0_74 = arith.constant 0 : index
    %234 = vector.load %arg13[%c0_73, %c0_74] : memref<4x1xf32, #tpu.memory_space<vmem>>, vector<4x1xf32>
    tpu.vector_store %arg13[%c0_73, %c0_74], %233 {strides = array<i32>} : memref<4x1xf32, #tpu.memory_space<vmem>>, vector<4x1xf32>,
    return
  }
  func.func @transform_0(%arg0: i32) -> (i32, i32, i32) {
    %c0_i32 = arith.constant 0 : i32
    %c0_i32_0 = arith.constant 0 : i32
    %c0_i32_1 = arith.constant 0 : i32
    %c0_i32_2 = arith.constant 0 : i32
    return %c0_i32, %c0_i32_0, %c0_i32_1 : i32, i32, i32
  }
  func.func @transform_1(%arg0: i32) -> (i32, i32) {
    %c0_i32 = arith.constant 0 : i32
    %c0_i32_0 = arith.constant 0 : i32
    %c0_i32_1 = arith.constant 0 : i32
    return %c0_i32, %c0_i32_0 : i32, i32
  }
  func.func @transform_2(%arg0: i32) -> (i32, i32) {
    %c0_i32 = arith.constant 0 : i32
    %c0_i32_0 = arith.constant 0 : i32
    %c0_i32_1 = arith.constant 0 : i32
    return %c0_i32, %c0_i32_0 : i32, i32
  }
  func.func @transform_3(%arg0: i32) -> (i32, i32) {
    %c0_i32 = arith.constant 0 : i32
    %c0_i32_0 = arith.constant 0 : i32
    %c0_i32_1 = arith.constant 0 : i32
    return %c0_i32, %c0_i32_0 : i32, i32
  }
  func.func @transform_4(%arg0: i32) -> (i32, i32) {
    %c0_i32 = arith.constant 0 : i32
    %c0_i32_0 = arith.constant 0 : i32
    %c0_i32_1 = arith.constant 0 : i32
    return %c0_i32, %c0_i32_0 : i32, i32
  }
  func.func @transform_5(%arg0: i32) -> (i32, i32) {
    %c0_i32 = arith.constant 0 : i32
    %c0_i32_0 = arith.constant 0 : i32
    %c0_i32_1 = arith.constant 0 : i32
    return %c0_i32, %c0_i32_0 : i32, i32
  }
  func.func @transform_6(%arg0: i32) -> (i32, i32) {
    %c0_i32 = arith.constant 0 : i32
    %c0_i32_0 = arith.constant 0 : i32
    %c0_i32_1 = arith.constant 0 : i32
    return %c0_i32, %c0_i32_0 : i32, i32
  }
  func.func @transform_7(%arg0: i32) -> (i32, i32) {
    %c0_i32 = arith.constant 0 : i32
    %c0_i32_0 = arith.constant 0 : i32
    %c0_i32_1 = arith.constant 0 : i32
    return %c0_i32, %c0_i32_0 : i32, i32
  }
  func.func @transform_8(%arg0: i32) -> (i32, i32, i32) {
    %c0_i32 = arith.constant 0 : i32
    %c0_i32_0 = arith.constant 0 : i32
    %c0_i32_1 = arith.constant 0 : i32
    %c0_i32_2 = arith.constant 0 : i32
    return %c0_i32, %c0_i32_0, %c0_i32_1 : i32, i32, i32
  }
  func.func @transform_9(%arg0: i32) -> (i32, i32) {
    %c0_i32 = arith.constant 0 : i32
    %c0_i32_0 = arith.constant 0 : i32
    %c0_i32_1 = arith.constant 0 : i32
    return %c0_i32, %c0_i32_0 : i32, i32
  }
  func.func @transform_10(%arg0: i32) -> (i32, i32) {
    %c0_i32 = arith.constant 0 : i32
    %c0_i32_0 = arith.constant 0 : i32
    %c0_i32_1 = arith.constant 0 : i32
    return %c0_i32, %c0_i32_0 : i32, i32
  }
  func.func @transform_11(%arg0: i32) -> (i32, i32) {
    %c0_i32 = arith.constant 0 : i32
    %c0_i32_0 = arith.constant 0 : i32
    %c0_i32_1 = arith.constant 0 : i32
    return %c0_i32, %c0_i32_0 : i32, i32
  }
  func.func @transform_12(%arg0: i32) -> (i32, i32) {
    %c0_i32 = arith.constant 0 : i32
    %c0_i32_0 = arith.constant 0 : i32
    %c0_i32_1 = arith.constant 0 : i32
    return %c0_i32, %c0_i32_0 : i32, i32
  }
  func.func @transform_13(%arg0: i32) -> (i32, i32) {
    %c0_i32 = arith.constant 0 : i32
    %c0_i32_0 = arith.constant 0 : i32
    %c0_i32_1 = arith.constant 0 : i32
    return %c0_i32, %c0_i32_0 : i32, i32
  }
}

</mosaic_0001>

<llo_original>
// kernel: tpu_custom_call.1
$region0: #{tpu_custom_call.1}
  #allocation0 [shape = 'u32[]', space=smem, size = 0x4, offset = 0x4, fixed_abs, tag = 'smem constant byte address 0x4 - core index']
  #allocation1 [shape = 'u32[144,128]{1,0:T(1,128)}', space=vmem, size = 0x12000, scoped, tag = 'internal scratch']
  #allocation2 [shape = 'f32[1,1]{1,0:T(1,128)S(1)}', space=vmem, size = 0x200, scoped, tag = 'scoped memory for tpu_custom_call.1']
  %s0 = inlined_call_operand.hbm [shape: f32[4,4,100], index: 0, kind: input, shape index: {}]
  %s1 = inlined_call_operand.vmem [shape: f32[4,1], index: 1, kind: input, shape index: {}]
  %s2 = inlined_call_operand.hbm [shape: f32[100,128], index: 2, kind: input, shape index: {}]
  %s3 = inlined_call_operand.vmem [shape: f32[32,128], index: 3, kind: input, shape index: {}]
  %s4 = inlined_call_operand.vmem [shape: f32[1,128], index: 4, kind: input, shape index: {}]
  %s5 = inlined_call_operand.vmem [shape: f32[1,128], index: 5, kind: input, shape index: {}]
  %s6 = inlined_call_operand.hbm [shape: f32[32,128], index: 6, kind: input, shape index: {}]
  %s7 = inlined_call_operand.vmem [shape: f32[1,128], index: 7, kind: input, shape index: {}]
  %s8 = inlined_call_operand.hbm [shape: f32[2,32,32], index: 8, kind: input, shape index: {}]
  %s9 = inlined_call_operand.vmem [shape: f32[1,32], index: 9, kind: input, shape index: {}]
  %s10 = inlined_call_operand.vmem [shape: f32[32,1], index: 10, kind: input, shape index: {}]
  %s11 = inlined_call_operand.<no memory space> [shape: f32[1,1], index: 11, kind: input, shape index: {}]
  %s12 = inlined_call_operand.vmem [shape: f32[4,1], index: 12, kind: output, shape index: {0}]
  %s13 = inlined_call_operand.vmem [shape: f32[4,1], index: 13, kind: output, shape index: {1}]
  %14 = xla_tuple %s12, %s13
  %s15 = sld [smem:[#allocation0]]
  $region82: #{tpu_custom_call.1} parent=0
    _
  %s17 = ssub.s32 1, %s15
  %s18 = scalar_select 0, %s17, %s15
  %v19 = vstv %s11
  %20 = vst [vmem:[#allocation2] sm:$0x1] %v19
  $region1: #{tpu_custom_call.1} parent=0
    #allocation3 [shape = 'u8[8192]{0}', space=vmem, size = 0x2000, scoped, tag = 'input window, operand 0, single buffered']
    #allocation4 [shape = 's32[1]{0}', space=sflag, size = 0x4, scoped, tag = 'scoped memory for tpu_custom_call.1']
    #allocation5 [shape = 'u8[53248]{0}', space=vmem, size = 0xd000, scoped, tag = 'input window, operand 2, single buffered']
    #allocation6 [shape = 's32[1]{0}', space=sflag, size = 0x4, scoped, tag = 'scoped memory for tpu_custom_call.1']
    #allocation7 [shape = 'u8[16384]{0}', space=vmem, size = 0x4000, scoped, tag = 'input window, operand 6, single buffered']
    #allocation8 [shape = 'u8[32768]{0}', space=vmem, size = 0x8000, scoped, tag = 'input window, operand 8, single buffered']
    #allocation9 [shape = 's32[1]{0}', space=sflag, size = 0x4, scoped, tag = 'scoped memory for tpu_custom_call.1']
    %21 = vsyncpa [#allocation4], 0
    %22 = vsyncpa [#allocation6], 0
    %23 = vsyncpa [#allocation9], 0
    // Predicated region
    $region2: #{tpu_custom_call.1} parent=1 // pred_check
      _
    $region3: #{tpu_custom_call.1} parent=1 // pred_check_branch
      %25 = sbr.rel (0) target = $region5
    $region4: #{tpu_custom_call.1} parent=1 // pred_region
      %s27 = ssub.s32 256, 256
      %28 = vsyncadd [#allocation4], %s27
      %s29 = sshll.u32 [#allocation3], 4
      %s30 = int_to_ptr.vmem [resolvable:$true] %s29
      %35 = dma.hbm_to_vmem [thread:$0]  %s0, 256, %s30, [#allocation4], 64, 64, 4
    $region5: #{tpu_custom_call.1} parent=1 // pred_fallthru
      _
    // Predicated region
    $region6: #{tpu_custom_call.1} parent=1 // pred_check
      _
    $region7: #{tpu_custom_call.1} parent=1 // pred_check_branch
      %37 = sbr.rel (0) target = $region9
    $region8: #{tpu_custom_call.1} parent=1 // pred_region
      _
    $region9: #{tpu_custom_call.1} parent=1 // pred_fallthru
      _
    // Predicated region
    $region10: #{tpu_custom_call.1} parent=1 // pred_check
      _
    $region11: #{tpu_custom_call.1} parent=1 // pred_check_branch
      %39 = sbr.rel (0) target = $region13
    $region12: #{tpu_custom_call.1} parent=1 // pred_region
      %s41 = ssub.s32 1664, 1664
      %42 = vsyncadd [#allocation6], %s41
      %s43 = sshll.u32 [#allocation5], 4
      %s44 = int_to_ptr.vmem [resolvable:$true] %s43
      %49 = dma.hbm_to_vmem [thread:$0]  %s2, 1664, %s44, [#allocation6], 128, 128, 8
    $region13: #{tpu_custom_call.1} parent=1 // pred_fallthru
      _
    // Predicated region
    $region14: #{tpu_custom_call.1} parent=1 // pred_check
      _
    $region15: #{tpu_custom_call.1} parent=1 // pred_check_branch
      %51 = sbr.rel (0) target = $region17
    $region16: #{tpu_custom_call.1} parent=1 // pred_region
      _
    $region17: #{tpu_custom_call.1} parent=1 // pred_fallthru
      _
    // Predicated region
    $region18: #{tpu_custom_call.1} parent=1 // pred_check
      _
    $region19: #{tpu_custom_call.1} parent=1 // pred_check_branch
      %53 = sbr.rel (0) target = $region21
    $region20: #{tpu_custom_call.1} parent=1 // pred_region
      _
    $region21: #{tpu_custom_call.1} parent=1 // pred_fallthru
      _
    // Predicated region
    $region22: #{tpu_custom_call.1} parent=1 // pred_check
      _
    $region23: #{tpu_custom_call.1} parent=1 // pred_check_branch
      %55 = sbr.rel (0) target = $region25
    $region24: #{tpu_custom_call.1} parent=1 // pred_region
      _
    $region25: #{tpu_custom_call.1} parent=1 // pred_fallthru
      _
    // Predicated region
    $region26: #{tpu_custom_call.1} parent=1 // pred_check
      _
    $region27: #{tpu_custom_call.1} parent=1 // pred_check_branch
      %57 = sbr.rel (0) target = $region29
    $region28: #{tpu_custom_call.1} parent=1 // pred_region
      %s59 = ssub.s32 512, 512
      %60 = vsyncadd [#allocation6], %s59
      %s61 = sshll.u32 [#allocation7], 4
      %s62 = int_to_ptr.vmem [resolvable:$true] %s61
      %67 = dma.hbm_to_vmem [thread:$0]  %s6, 512, %s62, [#allocation6], 128, 128, 8
    $region29: #{tpu_custom_call.1} parent=1 // pred_fallthru
      _
    // Predicated region
    $region30: #{tpu_custom_call.1} parent=1 // pred_check
      _
    $region31: #{tpu_custom_call.1} parent=1 // pred_check_branch
      %69 = sbr.rel (0) target = $region33
    $region32: #{tpu_custom_call.1} parent=1 // pred_region
      _
    $region33: #{tpu_custom_call.1} parent=1 // pred_fallthru
      _
    // Predicated region
    $region34: #{tpu_custom_call.1} parent=1 // pred_check
      _
    $region35: #{tpu_custom_call.1} parent=1 // pred_check_branch
      %71 = sbr.rel (0) target = $region37
    $region36: #{tpu_custom_call.1} parent=1 // pred_region
      %s73 = ssub.s32 1024, 1024
      %74 = vsyncadd [#allocation9], %s73
      %s75 = sshll.u32 [#allocation8], 4
      %s76 = int_to_ptr.vmem [resolvable:$true] %s75
      %81 = dma.hbm_to_vmem [thread:$0]  %s8, 1024, %s76, [#allocation9], 128, 128, 8
    $region37: #{tpu_custom_call.1} parent=1 // pred_fallthru
      _
    // Predicated region
    $region38: #{tpu_custom_call.1} parent=1 // pred_check
      _
    $region39: #{tpu_custom_call.1} parent=1 // pred_check_branch
      %83 = sbr.rel (0) target = $region41
    $region40: #{tpu_custom_call.1} parent=1 // pred_region
      _
    $region41: #{tpu_custom_call.1} parent=1 // pred_fallthru
      _
    // Predicated region
    $region42: #{tpu_custom_call.1} parent=1 // pred_check
      _
    $region43: #{tpu_custom_call.1} parent=1 // pred_check_branch
      %85 = sbr.rel (0) target = $region45
    $region44: #{tpu_custom_call.1} parent=1 // pred_region
      _
    $region45: #{tpu_custom_call.1} parent=1 // pred_fallthru
      _
    // Predicated region
    $region46: #{tpu_custom_call.1} parent=1 // pred_check
      _
    $region47: #{tpu_custom_call.1} parent=1 // pred_check_branch
      %87 = sbr.rel (0) target = $region49
    $region48: #{tpu_custom_call.1} parent=1 // pred_region
      _
    $region49: #{tpu_custom_call.1} parent=1 // pred_fallthru
      _
    // Predicated region
    $region50: #{tpu_custom_call.1} parent=1 // pred_check
      _
    $region51: #{tpu_custom_call.1} parent=1 // pred_check_branch
      %89 = sbr.rel (0) target = $region53
    $region52: #{tpu_custom_call.1} parent=1 // pred_region
      %90 = dma.done [#allocation4], 256
    $region53: #{tpu_custom_call.1} parent=1 // pred_fallthru
      _
    // Predicated region
    $region54: #{tpu_custom_call.1} parent=1 // pred_check
      _
    $region55: #{tpu_custom_call.1} parent=1 // pred_check_branch
      %92 = sbr.rel (0) target = $region57
    $region56: #{tpu_custom_call.1} parent=1 // pred_region
      %93 = dma.done [#allocation6], 1664
    $region57: #{tpu_custom_call.1} parent=1 // pred_fallthru
      _
    // Predicated region
    $region58: #{tpu_custom_call.1} parent=1 // pred_check
      _
    $region59: #{tpu_custom_call.1} parent=1 // pred_check_branch
      %95 = sbr.rel (0) target = $region61
    $region60: #{tpu_custom_call.1} parent=1 // pred_region
      %96 = dma.done [#allocation6], 512
    $region61: #{tpu_custom_call.1} parent=1 // pred_fallthru
      _
    // Predicated region
    $region62: #{tpu_custom_call.1} parent=1 // pred_check
      _
    $region63: #{tpu_custom_call.1} parent=1 // pred_check_branch
      %98 = sbr.rel (0) target = $region65
    $region64: #{tpu_custom_call.1} parent=1 // pred_region
      %99 = dma.done [#allocation9], 1024
    $region65: #{tpu_custom_call.1} parent=1 // pred_fallthru
      _
    %v100 = vld [vmem:[#allocation5] sm:$0xff]
    %v101 = vld [vmem:[#allocation5 + $0x8] sm:$0xff]
    %v102 = vld [vmem:[#allocation5 + $0x10] sm:$0xff]
    %v103 = vld [vmem:[#allocation5 + $0x18] sm:$0xff]
    %v104 = vld [vmem:[#allocation5 + $0x20] sm:$0xff]
    %v105 = vld [vmem:[#allocation5 + $0x28] sm:$0xff]
    %v106 = vld [vmem:[#allocation5 + $0x30] sm:$0xff]
    %v107 = vld [vmem:[#allocation5 + $0x38] sm:$0xff]
    %v108 = vld [vmem:[#allocation5 + $0x40] sm:$0xff]
    %v109 = vld [vmem:[#allocation5 + $0x48] sm:$0xff]
    %v110 = vld [vmem:[#allocation5 + $0x50] sm:$0xff]
    %v111 = vld [vmem:[#allocation5 + $0x58] sm:$0xff]
    %v112 = vld [vmem:[#allocation5 + $0x60] sm:$0xf]
    %v113 = vld [vmem:[%s3] sm:$0xff]
    %v114 = vld [vmem:[%s3 + $0x8] sm:$0xff]
    %v115 = vld [vmem:[%s3 + $0x10] sm:$0xff]
    %v116 = vld [vmem:[%s3 + $0x18] sm:$0xff]
    %v117 = vld [vmem:[%s4] sm:$0x1]
    %v118 = vld [vmem:[#allocation3] sm:$0xf]
    %vm119 = vcmask 261120
    %v121 = vsel %vm119, 0.0, 0
    %123 = vmatprep.subr.mxu0 0.0
    %124 = vmatpush1.msra.mxu0 0.0
    %125 = vmatprep.subr.mxu0 0.0
    %126 = vmatpush1.msra.mxu0 0.0
    %127 = vmatprep.subr.mxu0 0.0
    %128 = vmatpush1.msra.mxu0 0.0
    %129 = vmatprep.subr.mxu0 0.0
    %130 = vmatpush1.msra.mxu0 0.0
    %131 = vmatprep.subr.mxu0 0.0
    %132 = vmatpush1.msra.mxu0 0.0
    %133 = vmatprep.subr.mxu0 0.0
    %134 = vmatpush1.msra.mxu0 0.0
    %135 = vmatprep.subr.mxu0 0.0
    %136 = vmatpush1.msra.mxu0 0.0
    %137 = vmatprep.subr.mxu0 0.0
    %138 = vmatpush1.msra.mxu0 0.0
    %139 = vmatprep.subr.mxu0 0.0
    %140 = vmatpush1.msra.mxu0 0.0
    %141 = vmatprep.subr.mxu0 0.0
    %142 = vmatpush1.msra.mxu0 0.0
    %143 = vmatprep.subr.mxu0 0.0
    %144 = vmatpush1.msra.mxu0 0.0
    %145 = vmatprep.subr.mxu0 0.0
    %146 = vmatpush1.msra.mxu0 0.0
    %147 = vmatprep.subr.mxu0 0.0
    %148 = vmatpush1.msra.mxu0 %v116
    %149 = vmatprep.subr.mxu0 0.0
    %150 = vmatpush1.msra.mxu0 %v115
    %151 = vmatprep.subr.mxu0 0.0
    %152 = vmatpush1.msra.mxu0 %v114
    %153 = vmatprep.subr.mxu0 0.0
    %154 = vmatpush1.msra.mxu0 %v113
    %155 = vmatprep.subr.mxu0 0.0
    %156 = vmatpush2.msra.mxu0 0.0
    %157 = vmatprep.subr.mxu0 0.0
    %158 = vmatpush2.msra.mxu0 0.0
    %159 = vmatprep.subr.mxu0 0.0
    %160 = vmatpush2.msra.mxu0 0.0
    %161 = vmatprep.subr.mxu0 0.0
    %162 = vmatpush2.msra.mxu0 0.0
    %163 = vmatprep.subr.mxu0 0.0
    %164 = vmatpush2.msra.mxu0 0.0
    %165 = vmatprep.subr.mxu0 0.0
    %166 = vmatpush2.msra.mxu0 0.0
    %167 = vmatprep.subr.mxu0 0.0
    %168 = vmatpush2.msra.mxu0 0.0
    %169 = vmatprep.subr.mxu0 0.0
    %170 = vmatpush2.msra.mxu0 0.0
    %171 = vmatprep.subr.mxu0 0.0
    %172 = vmatpush2.msra.mxu0 0.0
    %173 = vmatprep.subr.mxu0 0.0
    %174 = vmatpush2.msra.mxu0 0.0
    %175 = vmatprep.subr.mxu0 0.0
    %176 = vmatpush2.msra.mxu0 0.0
    %177 = vmatprep.subr.mxu0 0.0
    %178 = vmatpush2.msra.mxu0 0.0
    %179 = vmatprep.subr.mxu0 0.0
    %180 = vmatpush2.msra.mxu0 0.0
    %181 = vmatprep.subr.mxu0 0.0
    %182 = vmatpush2.msra.mxu0 0.0
    %183 = vmatprep.subr.mxu0 0.0
    %184 = vmatpush2.msra.mxu0 0.0
    %185 = vmatprep.subr.mxu0 0.0
    %186 = vmatpush2.msra.mxu0 0.0
    %187 = vmatprep.mubr.f32.mxu0 0.0
    %188 = vmatmul.mubr.f32.gmra.mxu0 %v121
    %v189 = vpop.f32.mrf.mxu0
    %v190 = vadd.f32 0.0, %v189
    %v191 = vpop.f32.mrf.mxu0
    %192 = vdwg.mxu0
    %vm193 = vcmask 818176
    %v195 = vsel %vm193, %v118, 0
    %vm197 = vcmask 1043456
    %v199 = vsel %vm197, %v112, 0
    %201 = vmatprep.subr.mxu0 0.0
    %202 = vmatpush1.msra.mxu0 0.0
    %203 = vmatprep.subr.mxu0 0.0
    %204 = vmatpush1.msra.mxu0 0.0
    %205 = vmatprep.subr.mxu0 0.0
    %206 = vmatpush1.msra.mxu0 0.0
    %207 = vmatprep.subr.mxu0 0.0
    %208 = vmatpush1.msra.mxu0 %v199
    %209 = vmatprep.subr.mxu0 0.0
    %210 = vmatpush1.msra.mxu0 %v111
    %211 = vmatprep.subr.mxu0 0.0
    %212 = vmatpush1.msra.mxu0 %v110
    %213 = vmatprep.subr.mxu0 0.0
    %214 = vmatpush1.msra.mxu0 %v109
    %215 = vmatprep.subr.mxu0 0.0
    %216 = vmatpush1.msra.mxu0 %v108
    %217 = vmatprep.subr.mxu0 0.0
    %218 = vmatpush1.msra.mxu0 %v107
    %219 = vmatprep.subr.mxu0 0.0
    %220 = vmatpush1.msra.mxu0 %v106
    %221 = vmatprep.subr.mxu0 0.0
    %222 = vmatpush1.msra.mxu0 %v105
    %223 = vmatprep.subr.mxu0 0.0
    %224 = vmatpush1.msra.mxu0 %v104
    %225 = vmatprep.subr.mxu0 0.0
    %226 = vmatpush1.msra.mxu0 %v103
    %227 = vmatprep.subr.mxu0 0.0
    %228 = vmatpush1.msra.mxu0 %v102
    %229 = vmatprep.subr.mxu0 0.0
    %230 = vmatpush1.msra.mxu0 %v101
    %231 = vmatprep.subr.mxu0 0.0
    %232 = vmatpush1.msra.mxu0 %v100
    %233 = vmatprep.subr.mxu0 0.0
    %234 = vmatpush2.msra.mxu0 0.0
    %235 = vmatprep.subr.mxu0 0.0
    %236 = vmatpush2.msra.mxu0 0.0
    %237 = vmatprep.subr.mxu0 0.0
    %238 = vmatpush2.msra.mxu0 0.0
    %239 = vmatprep.subr.mxu0 0.0
    %240 = vmatpush2.msra.mxu0 0.0
    %241 = vmatprep.subr.mxu0 0.0
    %242 = vmatpush2.msra.mxu0 0.0
    %243 = vmatprep.subr.mxu0 0.0
    %244 = vmatpush2.msra.mxu0 0.0
    %245 = vmatprep.subr.mxu0 0.0
    %246 = vmatpush2.msra.mxu0 0.0
    %247 = vmatprep.subr.mxu0 0.0
    %248 = vmatpush2.msra.mxu0 0.0
    %249 = vmatprep.subr.mxu0 0.0
    %250 = vmatpush2.msra.mxu0 0.0
    %251 = vmatprep.subr.mxu0 0.0
    %252 = vmatpush2.msra.mxu0 0.0
    %253 = vmatprep.subr.mxu0 0.0
    %254 = vmatpush2.msra.mxu0 0.0
    %255 = vmatprep.subr.mxu0 0.0
    %256 = vmatpush2.msra.mxu0 0.0
    %257 = vmatprep.subr.mxu0 0.0
    %258 = vmatpush2.msra.mxu0 0.0
    %259 = vmatprep.subr.mxu0 0.0
    %260 = vmatpush2.msra.mxu0 0.0
    %261 = vmatprep.subr.mxu0 0.0
    %262 = vmatpush2.msra.mxu0 0.0
    %263 = vmatprep.subr.mxu0 0.0
    %264 = vmatpush2.msra.mxu0 0.0
    %265 = vmatprep.mubr.f32.mxu0 0.0
    %266 = vmatmul.mubr.f32.gmra.mxu0 %v195
    %v267 = vpop.f32.mrf.mxu0
    %v268 = vadd.f32 %v190, %v267
    %v269 = vpop.f32.mrf.mxu0
    %270 = vdwg.mxu0
    %v272 = vlaneseq
    %v273 = vshrl.u32 %v272, 7
    %v274 = vsub.s32 0, %v273
    %v275 = vrot.slane %v117, %v274
    %v277 = vadd.f32 %v268, %v275
    %v278 = vxor.u32 %v277, 2147483648
    %v279 = vmul.f32 %v278, 1.442695
    %v280 = vpow.pop %v279
    %v281 = vadd.f32 %v280, 1.0
    %v282 = vrcp.pop %v281
    %v283 = vmul.f32 1.0, %v282
    %v284 = vtanh.pop %v277
    %v285 = vmul.f32 %v283, 0.0
    %287 = vrot.lane.b32.xlu0 %v284, 64
    %v288 = vpop.permute.xlu0 %287
    %v290 = vmul.f32 %v283, %v288
    %292 = vrot.lane.b32.xlu0 %v290, 32
    %v293 = vpop.permute.xlu0 %292
    %v295 = vadd.f32 %v285, %v293
    %v296 = vtanh.pop %v295
    %298 = vrot.lane.b32.xlu0 %v296, 64
    %v299 = vpop.permute.xlu0 %298
    %v301 = vmul.f32 %v283, %v299
    %s302 = scalar_lea.vmem [#allocation3], 4
    %v303 = vld [vmem:[%s302] sm:$0xf]
    %305 = vrot.lane.b32.xlu0 %v301, 32
    %v306 = vpop.permute.xlu0 %305
    %v307 = vsel %vm119, %v306, 0
    %309 = vmatprep.subr.mxu0 0.0
    %310 = vmatpush1.msra.mxu0 0.0
    %311 = vmatprep.subr.mxu0 0.0
    %312 = vmatpush1.msra.mxu0 0.0
    %313 = vmatprep.subr.mxu0 0.0
    %314 = vmatpush1.msra.mxu0 0.0
    %315 = vmatprep.subr.mxu0 0.0
    %316 = vmatpush1.msra.mxu0 0.0
    %317 = vmatprep.subr.mxu0 0.0
    %318 = vmatpush1.msra.mxu0 0.0
    %319 = vmatprep.subr.mxu0 0.0
    %320 = vmatpush1.msra.mxu0 0.0
    %321 = vmatprep.subr.mxu0 0.0
    %322 = vmatpush1.msra.mxu0 0.0
    %323 = vmatprep.subr.mxu0 0.0
    %324 = vmatpush1.msra.mxu0 0.0
    %325 = vmatprep.subr.mxu0 0.0
    %326 = vmatpush1.msra.mxu0 0.0
    %327 = vmatprep.subr.mxu0 0.0
    %328 = vmatpush1.msra.mxu0 0.0
    %329 = vmatprep.subr.mxu0 0.0
    %330 = vmatpush1.msra.mxu0 0.0
    %331 = vmatprep.subr.mxu0 0.0
    %332 = vmatpush1.msra.mxu0 0.0
    %333 = vmatprep.subr.mxu0 0.0
    %334 = vmatpush1.msra.mxu0 %v116
    %335 = vmatprep.subr.mxu0 0.0
    %336 = vmatpush1.msra.mxu0 %v115
    %337 = vmatprep.subr.mxu0 0.0
    %338 = vmatpush1.msra.mxu0 %v114
    %339 = vmatprep.subr.mxu0 0.0
    %340 = vmatpush1.msra.mxu0 %v113
    %341 = vmatprep.subr.mxu0 0.0
    %342 = vmatpush2.msra.mxu0 0.0
    %343 = vmatprep.subr.mxu0 0.0
    %344 = vmatpush2.msra.mxu0 0.0
    %345 = vmatprep.subr.mxu0 0.0
    %346 = vmatpush2.msra.mxu0 0.0
    %347 = vmatprep.subr.mxu0 0.0
    %348 = vmatpush2.msra.mxu0 0.0
    %349 = vmatprep.subr.mxu0 0.0
    %350 = vmatpush2.msra.mxu0 0.0
    %351 = vmatprep.subr.mxu0 0.0
    %352 = vmatpush2.msra.mxu0 0.0
    %353 = vmatprep.subr.mxu0 0.0
    %354 = vmatpush2.msra.mxu0 0.0
    %355 = vmatprep.subr.mxu0 0.0
    %356 = vmatpush2.msra.mxu0 0.0
    %357 = vmatprep.subr.mxu0 0.0
    %358 = vmatpush2.msra.mxu0 0.0
    %359 = vmatprep.subr.mxu0 0.0
    %360 = vmatpush2.msra.mxu0 0.0
    %361 = vmatprep.subr.mxu0 0.0
    %362 = vmatpush2.msra.mxu0 0.0
    %363 = vmatprep.subr.mxu0 0.0
    %364 = vmatpush2.msra.mxu0 0.0
    %365 = vmatprep.subr.mxu0 0.0
    %366 = vmatpush2.msra.mxu0 0.0
    %367 = vmatprep.subr.mxu0 0.0
    %368 = vmatpush2.msra.mxu0 0.0
    %369 = vmatprep.subr.mxu0 0.0
    %370 = vmatpush2.msra.mxu0 0.0
    %371 = vmatprep.subr.mxu0 0.0
    %372 = vmatpush2.msra.mxu0 0.0
    %373 = vmatprep.mubr.f32.mxu0 0.0
    %374 = vmatmul.mubr.f32.gmra.mxu0 %v307
    %v375 = vpop.f32.mrf.mxu0
    %v376 = vadd.f32 0.0, %v375
    %v377 = vpop.f32.mrf.mxu0
    %378 = vdwg.mxu0
    %v380 = vsel %vm193, %v303, 0
    %382 = vmatprep.subr.mxu0 0.0
    %383 = vmatpush1.msra.mxu0 0.0
    %384 = vmatprep.subr.mxu0 0.0
    %385 = vmatpush1.msra.mxu0 0.0
    %386 = vmatprep.subr.mxu0 0.0
    %387 = vmatpush1.msra.mxu0 0.0
    %388 = vmatprep.subr.mxu0 0.0
    %389 = vmatpush1.msra.mxu0 %v199
    %390 = vmatprep.subr.mxu0 0.0
    %391 = vmatpush1.msra.mxu0 %v111
    %392 = vmatprep.subr.mxu0 0.0
    %393 = vmatpush1.msra.mxu0 %v110
    %394 = vmatprep.subr.mxu0 0.0
    %395 = vmatpush1.msra.mxu0 %v109
    %396 = vmatprep.subr.mxu0 0.0
    %397 = vmatpush1.msra.mxu0 %v108
    %398 = vmatprep.subr.mxu0 0.0
    %399 = vmatpush1.msra.mxu0 %v107
    %400 = vmatprep.subr.mxu0 0.0
    %401 = vmatpush1.msra.mxu0 %v106
    %402 = vmatprep.subr.mxu0 0.0
    %403 = vmatpush1.msra.mxu0 %v105
    %404 = vmatprep.subr.mxu0 0.0
    %405 = vmatpush1.msra.mxu0 %v104
    %406 = vmatprep.subr.mxu0 0.0
    %407 = vmatpush1.msra.mxu0 %v103
    %408 = vmatprep.subr.mxu0 0.0
    %409 = vmatpush1.msra.mxu0 %v102
    %410 = vmatprep.subr.mxu0 0.0
    %411 = vmatpush1.msra.mxu0 %v101
    %412 = vmatprep.subr.mxu0 0.0
    %413 = vmatpush1.msra.mxu0 %v100
    %414 = vmatprep.subr.mxu0 0.0
    %415 = vmatpush2.msra.mxu0 0.0
    %416 = vmatprep.subr.mxu0 0.0
    %417 = vmatpush2.msra.mxu0 0.0
    %418 = vmatprep.subr.mxu0 0.0
    %419 = vmatpush2.msra.mxu0 0.0
    %420 = vmatprep.subr.mxu0 0.0
    %421 = vmatpush2.msra.mxu0 0.0
    %422 = vmatprep.subr.mxu0 0.0
    %423 = vmatpush2.msra.mxu0 0.0
    %424 = vmatprep.subr.mxu0 0.0
    %425 = vmatpush2.msra.mxu0 0.0
    %426 = vmatprep.subr.mxu0 0.0
    %427 = vmatpush2.msra.mxu0 0.0
    %428 = vmatprep.subr.mxu0 0.0
    %429 = vmatpush2.msra.mxu0 0.0
    %430 = vmatprep.subr.mxu0 0.0
    %431 = vmatpush2.msra.mxu0 0.0
    %432 = vmatprep.subr.mxu0 0.0
    %433 = vmatpush2.msra.mxu0 0.0
    %434 = vmatprep.subr.mxu0 0.0
    %435 = vmatpush2.msra.mxu0 0.0
    %436 = vmatprep.subr.mxu0 0.0
    %437 = vmatpush2.msra.mxu0 0.0
    %438 = vmatprep.subr.mxu0 0.0
    %439 = vmatpush2.msra.mxu0 0.0
    %440 = vmatprep.subr.mxu0 0.0
    %441 = vmatpush2.msra.mxu0 0.0
    %442 = vmatprep.subr.mxu0 0.0
    %443 = vmatpush2.msra.mxu0 0.0
    %444 = vmatprep.subr.mxu0 0.0
    %445 = vmatpush2.msra.mxu0 0.0
    %446 = vmatprep.mubr.f32.mxu0 0.0
    %447 = vmatmul.mubr.f32.gmra.mxu0 %v380
    %v448 = vpop.f32.mrf.mxu0
    %v449 = vadd.f32 %v376, %v448
    %v450 = vpop.f32.mrf.mxu0
    %451 = vdwg.mxu0
    %v452 = vadd.f32 %v449, %v275
    %v453 = vxor.u32 %v452, 2147483648
    %v454 = vmul.f32 %v453, 1.442695
    %v455 = vpow.pop %v454
    %v456 = vadd.f32 %v455, 1.0
    %v457 = vrcp.pop %v456
    %v458 = vmul.f32 1.0, %v457
    %v459 = vtanh.pop %v452
    %v460 = vmul.f32 %v458, %v295
    %462 = vrot.lane.b32.xlu0 %v459, 64
    %v463 = vpop.permute.xlu0 %462
    %v465 = vmul.f32 %v458, %v463
    %467 = vrot.lane.b32.xlu0 %v465, 32
    %v468 = vpop.permute.xlu0 %467
    %v470 = vadd.f32 %v460, %v468
    %v471 = vtanh.pop %v470
    %473 = vrot.lane.b32.xlu0 %v471, 64
    %v474 = vpop.permute.xlu0 %473
    %v476 = vmul.f32 %v458, %v474
    %s477 = scalar_lea.vmem [#allocation3], 8
    %v478 = vld [vmem:[%s477] sm:$0xf]
    %480 = vrot.lane.b32.xlu0 %v476, 32
    %v481 = vpop.permute.xlu0 %480
    %v482 = vsel %vm119, %v481, 0
    %484 = vmatprep.subr.mxu0 0.0
    %485 = vmatpush1.msra.mxu0 0.0
    %486 = vmatprep.subr.mxu0 0.0
    %487 = vmatpush1.msra.mxu0 0.0
    %488 = vmatprep.subr.mxu0 0.0
    %489 = vmatpush1.msra.mxu0 0.0
    %490 = vmatprep.subr.mxu0 0.0
    %491 = vmatpush1.msra.mxu0 0.0
    %492 = vmatprep.subr.mxu0 0.0
    %493 = vmatpush1.msra.mxu0 0.0
    %494 = vmatprep.subr.mxu0 0.0
    %495 = vmatpush1.msra.mxu0 0.0
    %496 = vmatprep.subr.mxu0 0.0
    %497 = vmatpush1.msra.mxu0 0.0
    %498 = vmatprep.subr.mxu0 0.0
    %499 = vmatpush1.msra.mxu0 0.0
    %500 = vmatprep.subr.mxu0 0.0
    %501 = vmatpush1.msra.mxu0 0.0
    %502 = vmatprep.subr.mxu0 0.0
    %503 = vmatpush1.msra.mxu0 0.0
    %504 = vmatprep.subr.mxu0 0.0
    %505 = vmatpush1.msra.mxu0 0.0
    %506 = vmatprep.subr.mxu0 0.0
    %507 = vmatpush1.msra.mxu0 0.0
    %508 = vmatprep.subr.mxu0 0.0
    %509 = vmatpush1.msra.mxu0 %v116
    %510 = vmatprep.subr.mxu0 0.0
    %511 = vmatpush1.msra.mxu0 %v115
    %512 = vmatprep.subr.mxu0 0.0
    %513 = vmatpush1.msra.mxu0 %v114
    %514 = vmatprep.subr.mxu0 0.0
    %515 = vmatpush1.msra.mxu0 %v113
    %516 = vmatprep.subr.mxu0 0.0
    %517 = vmatpush2.msra.mxu0 0.0
    %518 = vmatprep.subr.mxu0 0.0
    %519 = vmatpush2.msra.mxu0 0.0
    %520 = vmatprep.subr.mxu0 0.0
    %521 = vmatpush2.msra.mxu0 0.0
    %522 = vmatprep.subr.mxu0 0.0
    %523 = vmatpush2.msra.mxu0 0.0
    %524 = vmatprep.subr.mxu0 0.0
    %525 = vmatpush2.msra.mxu0 0.0
    %526 = vmatprep.subr.mxu0 0.0
    %527 = vmatpush2.msra.mxu0 0.0
    %528 = vmatprep.subr.mxu0 0.0
    %529 = vmatpush2.msra.mxu0 0.0
    %530 = vmatprep.subr.mxu0 0.0
    %531 = vmatpush2.msra.mxu0 0.0
    %532 = vmatprep.subr.mxu0 0.0
    %533 = vmatpush2.msra.mxu0 0.0
    %534 = vmatprep.subr.mxu0 0.0
    %535 = vmatpush2.msra.mxu0 0.0
    %536 = vmatprep.subr.mxu0 0.0
    %537 = vmatpush2.msra.mxu0 0.0
    %538 = vmatprep.subr.mxu0 0.0
    %539 = vmatpush2.msra.mxu0 0.0
    %540 = vmatprep.subr.mxu0 0.0
    %541 = vmatpush2.msra.mxu0 0.0
    %542 = vmatprep.subr.mxu0 0.0
    %543 = vmatpush2.msra.mxu0 0.0
    %544 = vmatprep.subr.mxu0 0.0
    %545 = vmatpush2.msra.mxu0 0.0
    %546 = vmatprep.subr.mxu0 0.0
    %547 = vmatpush2.msra.mxu0 0.0
    %548 = vmatprep.mubr.f32.mxu0 0.0
    %549 = vmatmul.mubr.f32.gmra.mxu0 %v482
    %v550 = vpop.f32.mrf.mxu0
    %v551 = vadd.f32 0.0, %v550
    %v552 = vpop.f32.mrf.mxu0
    %553 = vdwg.mxu0
    %v555 = vsel %vm193, %v478, 0
    %557 = vmatprep.subr.mxu0 0.0
    %558 = vmatpush1.msra.mxu0 0.0
    %559 = vmatprep.subr.mxu0 0.0
    %560 = vmatpush1.msra.mxu0 0.0
    %561 = vmatprep.subr.mxu0 0.0
    %562 = vmatpush1.msra.mxu0 0.0
    %563 = vmatprep.subr.mxu0 0.0
    %564 = vmatpush1.msra.mxu0 %v199
    %565 = vmatprep.subr.mxu0 0.0
    %566 = vmatpush1.msra.mxu0 %v111
    %567 = vmatprep.subr.mxu0 0.0
    %568 = vmatpush1.msra.mxu0 %v110
    %569 = vmatprep.subr.mxu0 0.0
    %570 = vmatpush1.msra.mxu0 %v109
    %571 = vmatprep.subr.mxu0 0.0
    %572 = vmatpush1.msra.mxu0 %v108
    %573 = vmatprep.subr.mxu0 0.0
    %574 = vmatpush1.msra.mxu0 %v107
    %575 = vmatprep.subr.mxu0 0.0
    %576 = vmatpush1.msra.mxu0 %v106
    %577 = vmatprep.subr.mxu0 0.0
    %578 = vmatpush1.msra.mxu0 %v105
    %579 = vmatprep.subr.mxu0 0.0
    %580 = vmatpush1.msra.mxu0 %v104
    %581 = vmatprep.subr.mxu0 0.0
    %582 = vmatpush1.msra.mxu0 %v103
    %583 = vmatprep.subr.mxu0 0.0
    %584 = vmatpush1.msra.mxu0 %v102
    %585 = vmatprep.subr.mxu0 0.0
    %586 = vmatpush1.msra.mxu0 %v101
    %587 = vmatprep.subr.mxu0 0.0
    %588 = vmatpush1.msra.mxu0 %v100
    %589 = vmatprep.subr.mxu0 0.0
    %590 = vmatpush2.msra.mxu0 0.0
    %591 = vmatprep.subr.mxu0 0.0
    %592 = vmatpush2.msra.mxu0 0.0
    %593 = vmatprep.subr.mxu0 0.0
    %594 = vmatpush2.msra.mxu0 0.0
    %595 = vmatprep.subr.mxu0 0.0
    %596 = vmatpush2.msra.mxu0 0.0
    %597 = vmatprep.subr.mxu0 0.0
    %598 = vmatpush2.msra.mxu0 0.0
    %599 = vmatprep.subr.mxu0 0.0
    %600 = vmatpush2.msra.mxu0 0.0
    %601 = vmatprep.subr.mxu0 0.0
    %602 = vmatpush2.msra.mxu0 0.0
    %603 = vmatprep.subr.mxu0 0.0
    %604 = vmatpush2.msra.mxu0 0.0
    %605 = vmatprep.subr.mxu0 0.0
    %606 = vmatpush2.msra.mxu0 0.0
    %607 = vmatprep.subr.mxu0 0.0
    %608 = vmatpush2.msra.mxu0 0.0
    %609 = vmatprep.subr.mxu0 0.0
    %610 = vmatpush2.msra.mxu0 0.0
    %611 = vmatprep.subr.mxu0 0.0
    %612 = vmatpush2.msra.mxu0 0.0
    %613 = vmatprep.subr.mxu0 0.0
    %614 = vmatpush2.msra.mxu0 0.0
    %615 = vmatprep.subr.mxu0 0.0
    %616 = vmatpush2.msra.mxu0 0.0
    %617 = vmatprep.subr.mxu0 0.0
    %618 = vmatpush2.msra.mxu0 0.0
    %619 = vmatprep.subr.mxu0 0.0
    %620 = vmatpush2.msra.mxu0 0.0
    %621 = vmatprep.mubr.f32.mxu0 0.0
    %622 = vmatmul.mubr.f32.gmra.mxu0 %v555
    %v623 = vpop.f32.mrf.mxu0
    %v624 = vadd.f32 %v551, %v623
    %v625 = vpop.f32.mrf.mxu0
    %626 = vdwg.mxu0
    %v627 = vadd.f32 %v624, %v275
    %v628 = vxor.u32 %v627, 2147483648
    %v629 = vmul.f32 %v628, 1.442695
    %v630 = vpow.pop %v629
    %v631 = vadd.f32 %v630, 1.0
    %v632 = vrcp.pop %v631
    %v633 = vmul.f32 1.0, %v632
    %v634 = vtanh.pop %v627
    %v635 = vmul.f32 %v633, %v470
    %637 = vrot.lane.b32.xlu0 %v634, 64
    %v638 = vpop.permute.xlu0 %637
    %v640 = vmul.f32 %v633, %v638
    %642 = vrot.lane.b32.xlu0 %v640, 32
    %v643 = vpop.permute.xlu0 %642
    %v645 = vadd.f32 %v635, %v643
    %v646 = vtanh.pop %v645
    %648 = vrot.lane.b32.xlu0 %v646, 64
    %v649 = vpop.permute.xlu0 %648
    %v651 = vmul.f32 %v633, %v649
    %s652 = scalar_lea.vmem [#allocation3], 12
    %v653 = vld [vmem:[%s652] sm:$0xf]
    %655 = vrot.lane.b32.xlu0 %v651, 32
    %v656 = vpop.permute.xlu0 %655
    %v657 = vsel %vm119, %v656, 0
    %659 = vmatprep.subr.mxu0 0.0
    %660 = vmatpush1.msra.mxu0 0.0
    %661 = vmatprep.subr.mxu0 0.0
    %662 = vmatpush1.msra.mxu0 0.0
    %663 = vmatprep.subr.mxu0 0.0
    %664 = vmatpush1.msra.mxu0 0.0
    %665 = vmatprep.subr.mxu0 0.0
    %666 = vmatpush1.msra.mxu0 0.0
    %667 = vmatprep.subr.mxu0 0.0
    %668 = vmatpush1.msra.mxu0 0.0
    %669 = vmatprep.subr.mxu0 0.0
    %670 = vmatpush1.msra.mxu0 0.0
    %671 = vmatprep.subr.mxu0 0.0
    %672 = vmatpush1.msra.mxu0 0.0
    %673 = vmatprep.subr.mxu0 0.0
    %674 = vmatpush1.msra.mxu0 0.0
    %675 = vmatprep.subr.mxu0 0.0
    %676 = vmatpush1.msra.mxu0 0.0
    %677 = vmatprep.subr.mxu0 0.0
    %678 = vmatpush1.msra.mxu0 0.0
    %679 = vmatprep.subr.mxu0 0.0
    %680 = vmatpush1.msra.mxu0 0.0
    %681 = vmatprep.subr.mxu0 0.0
    %682 = vmatpush1.msra.mxu0 0.0
    %683 = vmatprep.subr.mxu0 0.0
    %684 = vmatpush1.msra.mxu0 %v116
    %685 = vmatprep.subr.mxu0 0.0
    %686 = vmatpush1.msra.mxu0 %v115
    %687 = vmatprep.subr.mxu0 0.0
    %688 = vmatpush1.msra.mxu0 %v114
    %689 = vmatprep.subr.mxu0 0.0
    %690 = vmatpush1.msra.mxu0 %v113
    %691 = vmatprep.subr.mxu0 0.0
    %692 = vmatpush2.msra.mxu0 0.0
    %693 = vmatprep.subr.mxu0 0.0
    %694 = vmatpush2.msra.mxu0 0.0
    %695 = vmatprep.subr.mxu0 0.0
    %696 = vmatpush2.msra.mxu0 0.0
    %697 = vmatprep.subr.mxu0 0.0
    %698 = vmatpush2.msra.mxu0 0.0
    %699 = vmatprep.subr.mxu0 0.0
    %700 = vmatpush2.msra.mxu0 0.0
    %701 = vmatprep.subr.mxu0 0.0
    %702 = vmatpush2.msra.mxu0 0.0
    %703 = vmatprep.subr.mxu0 0.0
    %704 = vmatpush2.msra.mxu0 0.0
    %705 = vmatprep.subr.mxu0 0.0
    %706 = vmatpush2.msra.mxu0 0.0
    %707 = vmatprep.subr.mxu0 0.0
    %708 = vmatpush2.msra.mxu0 0.0
    %709 = vmatprep.subr.mxu0 0.0
    %710 = vmatpush2.msra.mxu0 0.0
    %711 = vmatprep.subr.mxu0 0.0
    %712 = vmatpush2.msra.mxu0 0.0
    %713 = vmatprep.subr.mxu0 0.0
    %714 = vmatpush2.msra.mxu0 0.0
    %715 = vmatprep.subr.mxu0 0.0
    %716 = vmatpush2.msra.mxu0 0.0
    %717 = vmatprep.subr.mxu0 0.0
    %718 = vmatpush2.msra.mxu0 0.0
    %719 = vmatprep.subr.mxu0 0.0
    %720 = vmatpush2.msra.mxu0 0.0
    %721 = vmatprep.subr.mxu0 0.0
    %722 = vmatpush2.msra.mxu0 0.0
    %723 = vmatprep.mubr.f32.mxu0 0.0
    %724 = vmatmul.mubr.f32.gmra.mxu0 %v657
    %v725 = vpop.f32.mrf.mxu0
    %v726 = vadd.f32 0.0, %v725
    %v727 = vpop.f32.mrf.mxu0
    %728 = vdwg.mxu0
    %v730 = vsel %vm193, %v653, 0
    %732 = vmatprep.subr.mxu0 0.0
    %733 = vmatpush1.msra.mxu0 0.0
    %734 = vmatprep.subr.mxu0 0.0
    %735 = vmatpush1.msra.mxu0 0.0
    %736 = vmatprep.subr.mxu0 0.0
    %737 = vmatpush1.msra.mxu0 0.0
    %738 = vmatprep.subr.mxu0 0.0
    %739 = vmatpush1.msra.mxu0 %v199
    %740 = vmatprep.subr.mxu0 0.0
    %741 = vmatpush1.msra.mxu0 %v111
    %742 = vmatprep.subr.mxu0 0.0
    %743 = vmatpush1.msra.mxu0 %v110
    %744 = vmatprep.subr.mxu0 0.0
    %745 = vmatpush1.msra.mxu0 %v109
    %746 = vmatprep.subr.mxu0 0.0
    %747 = vmatpush1.msra.mxu0 %v108
    %748 = vmatprep.subr.mxu0 0.0
    %749 = vmatpush1.msra.mxu0 %v107
    %750 = vmatprep.subr.mxu0 0.0
    %751 = vmatpush1.msra.mxu0 %v106
    %752 = vmatprep.subr.mxu0 0.0
    %753 = vmatpush1.msra.mxu0 %v105
    %754 = vmatprep.subr.mxu0 0.0
    %755 = vmatpush1.msra.mxu0 %v104
    %756 = vmatprep.subr.mxu0 0.0
    %757 = vmatpush1.msra.mxu0 %v103
    %758 = vmatprep.subr.mxu0 0.0
    %759 = vmatpush1.msra.mxu0 %v102
    %760 = vmatprep.subr.mxu0 0.0
    %761 = vmatpush1.msra.mxu0 %v101
    %762 = vmatprep.subr.mxu0 0.0
    %763 = vmatpush1.msra.mxu0 %v100
    %764 = vmatprep.subr.mxu0 0.0
    %765 = vmatpush2.msra.mxu0 0.0
    %766 = vmatprep.subr.mxu0 0.0
    %767 = vmatpush2.msra.mxu0 0.0
    %768 = vmatprep.subr.mxu0 0.0
    %769 = vmatpush2.msra.mxu0 0.0
    %770 = vmatprep.subr.mxu0 0.0
    %771 = vmatpush2.msra.mxu0 0.0
    %772 = vmatprep.subr.mxu0 0.0
    %773 = vmatpush2.msra.mxu0 0.0
    %774 = vmatprep.subr.mxu0 0.0
    %775 = vmatpush2.msra.mxu0 0.0
    %776 = vmatprep.subr.mxu0 0.0
    %777 = vmatpush2.msra.mxu0 0.0
    %778 = vmatprep.subr.mxu0 0.0
    %779 = vmatpush2.msra.mxu0 0.0
    %780 = vmatprep.subr.mxu0 0.0
    %781 = vmatpush2.msra.mxu0 0.0
    %782 = vmatprep.subr.mxu0 0.0
    %783 = vmatpush2.msra.mxu0 0.0
    %784 = vmatprep.subr.mxu0 0.0
    %785 = vmatpush2.msra.mxu0 0.0
    %786 = vmatprep.subr.mxu0 0.0
    %787 = vmatpush2.msra.mxu0 0.0
    %788 = vmatprep.subr.mxu0 0.0
    %789 = vmatpush2.msra.mxu0 0.0
    %790 = vmatprep.subr.mxu0 0.0
    %791 = vmatpush2.msra.mxu0 0.0
    %792 = vmatprep.subr.mxu0 0.0
    %793 = vmatpush2.msra.mxu0 0.0
    %794 = vmatprep.subr.mxu0 0.0
    %795 = vmatpush2.msra.mxu0 0.0
    %796 = vmatprep.mubr.f32.mxu0 0.0
    %797 = vmatmul.mubr.f32.gmra.mxu0 %v730
    %v798 = vpop.f32.mrf.mxu0
    %v799 = vadd.f32 %v726, %v798
    %v800 = vpop.f32.mrf.mxu0
    %801 = vdwg.mxu0
    %v802 = vadd.f32 %v799, %v275
    %v803 = vxor.u32 %v802, 2147483648
    %v804 = vmul.f32 %v803, 1.442695
    %v805 = vpow.pop %v804
    %v806 = vadd.f32 %v805, 1.0
    %v807 = vrcp.pop %v806
    %v808 = vmul.f32 1.0, %v807
    %v809 = vtanh.pop %v802
    %v810 = vmul.f32 %v808, %v645
    %812 = vrot.lane.b32.xlu0 %v809, 64
    %v813 = vpop.permute.xlu0 %812
    %v815 = vmul.f32 %v808, %v813
    %817 = vrot.lane.b32.xlu0 %v815, 32
    %v818 = vpop.permute.xlu0 %817
    %v820 = vadd.f32 %v810, %v818
    %v821 = vtanh.pop %v820
    %823 = vrot.lane.b32.xlu0 %v821, 64
    %v824 = vpop.permute.xlu0 %823
    %v826 = vmul.f32 %v808, %v824
    %v827 = vld [vmem:[%s1] sm:$0xf]
    %v828 = vld [vmem:[%s5] sm:$0x1]
    %830 = vset.pattern.permute.xlu0 0
    %831 = vperm.xlu0 %830, %v827
    %v832 = vpop.permute.xlu0 %831
    %v835 = vlaneseq
    %v836 = vshrl.u32 %v835, 7
    %v837 = vsub.s32 0, %v836
    %v838 = vrot.slane %v828, %v837
    %v840 = vmul.f32 %v832, %v838
    %v841 = vld [vmem:[#allocation7] sm:$0xff]
    %v842 = vld [vmem:[#allocation7 + $0x8] sm:$0xff]
    %v843 = vld [vmem:[#allocation7 + $0x10] sm:$0xff]
    %v844 = vld [vmem:[#allocation7 + $0x18] sm:$0xff]
    %846 = vrot.lane.b32.xlu0 %v826, 32
    %v847 = vpop.permute.xlu0 %846
    %v848 = vsel %vm119, %v847, 0
    %850 = vmatprep.subr.mxu0 0.0
    %851 = vmatpush1.msra.mxu0 0.0
    %852 = vmatprep.subr.mxu0 0.0
    %853 = vmatpush1.msra.mxu0 0.0
    %854 = vmatprep.subr.mxu0 0.0
    %855 = vmatpush1.msra.mxu0 0.0
    %856 = vmatprep.subr.mxu0 0.0
    %857 = vmatpush1.msra.mxu0 0.0
    %858 = vmatprep.subr.mxu0 0.0
    %859 = vmatpush1.msra.mxu0 0.0
    %860 = vmatprep.subr.mxu0 0.0
    %861 = vmatpush1.msra.mxu0 0.0
    %862 = vmatprep.subr.mxu0 0.0
    %863 = vmatpush1.msra.mxu0 0.0
    %864 = vmatprep.subr.mxu0 0.0
    %865 = vmatpush1.msra.mxu0 0.0
    %866 = vmatprep.subr.mxu0 0.0
    %867 = vmatpush1.msra.mxu0 0.0
    %868 = vmatprep.subr.mxu0 0.0
    %869 = vmatpush1.msra.mxu0 0.0
    %870 = vmatprep.subr.mxu0 0.0
    %871 = vmatpush1.msra.mxu0 0.0
    %872 = vmatprep.subr.mxu0 0.0
    %873 = vmatpush1.msra.mxu0 0.0
    %874 = vmatprep.subr.mxu0 0.0
    %875 = vmatpush1.msra.mxu0 %v844
    %876 = vmatprep.subr.mxu0 0.0
    %877 = vmatpush1.msra.mxu0 %v843
    %878 = vmatprep.subr.mxu0 0.0
    %879 = vmatpush1.msra.mxu0 %v842
    %880 = vmatprep.subr.mxu0 0.0
    %881 = vmatpush1.msra.mxu0 %v841
    %882 = vmatprep.subr.mxu0 0.0
    %883 = vmatpush2.msra.mxu0 0.0
    %884 = vmatprep.subr.mxu0 0.0
    %885 = vmatpush2.msra.mxu0 0.0
    %886 = vmatprep.subr.mxu0 0.0
    %887 = vmatpush2.msra.mxu0 0.0
    %888 = vmatprep.subr.mxu0 0.0
    %889 = vmatpush2.msra.mxu0 0.0
    %890 = vmatprep.subr.mxu0 0.0
    %891 = vmatpush2.msra.mxu0 0.0
    %892 = vmatprep.subr.mxu0 0.0
    %893 = vmatpush2.msra.mxu0 0.0
    %894 = vmatprep.subr.mxu0 0.0
    %895 = vmatpush2.msra.mxu0 0.0
    %896 = vmatprep.subr.mxu0 0.0
    %897 = vmatpush2.msra.mxu0 0.0
    %898 = vmatprep.subr.mxu0 0.0
    %899 = vmatpush2.msra.mxu0 0.0
    %900 = vmatprep.subr.mxu0 0.0
    %901 = vmatpush2.msra.mxu0 0.0
    %902 = vmatprep.subr.mxu0 0.0
    %903 = vmatpush2.msra.mxu0 0.0
    %904 = vmatprep.subr.mxu0 0.0
    %905 = vmatpush2.msra.mxu0 0.0
    %906 = vmatprep.subr.mxu0 0.0
    %907 = vmatpush2.msra.mxu0 0.0
    %908 = vmatprep.subr.mxu0 0.0
    %909 = vmatpush2.msra.mxu0 0.0
    %910 = vmatprep.subr.mxu0 0.0
    %911 = vmatpush2.msra.mxu0 0.0
    %912 = vmatprep.subr.mxu0 0.0
    %913 = vmatpush2.msra.mxu0 0.0
    %914 = vmatprep.mubr.f32.mxu0 0.0
    %915 = vmatmul.mubr.f32.gmra.mxu0 %v848
    %v916 = vpop.f32.mrf.mxu0
    %v917 = vadd.f32 0.0, %v916
    %v918 = vpop.f32.mrf.mxu0
    %919 = vdwg.mxu0
    %v920 = vadd.f32 %v840, %v917
    %v921 = vld [vmem:[%s7] sm:$0x1]
    %v923 = vlaneseq
    %v924 = vshrl.u32 %v923, 7
    %v925 = vsub.s32 0, %v924
    %v926 = vrot.slane %v921, %v925
    %v928 = vadd.f32 %v920, %v926
    %v929 = vxor.u32 %v928, 2147483648
    %v930 = vmul.f32 %v929, 1.442695
    %v931 = vpow.pop %v930
    %v932 = vadd.f32 %v931, 1.0
    %v933 = vrcp.pop %v932
    %v934 = vmul.f32 1.0, %v933
    %v935 = vtanh.pop %v928
    %v936 = vmul.f32 %v934, %v820
    %938 = vrot.lane.b32.xlu0 %v935, 64
    %v939 = vpop.permute.xlu0 %938
    %v941 = vmul.f32 %v934, %v939
    %943 = vrot.lane.b32.xlu0 %v941, 32
    %v944 = vpop.permute.xlu0 %943
    %v946 = vadd.f32 %v936, %v944
    %v947 = vtanh.pop %v946
    %949 = vrot.lane.b32.xlu0 %v947, 64
    %v950 = vpop.permute.xlu0 %949
    %v952 = vmul.f32 %v934, %v950
    %v953 = vmul.f32 %v301, %v952
    %955 = vrot.lane.b32.xlu0 %v953, 32
    %v956 = vpop.permute.xlu0 %955
    %vm958 = vcmask 257024
    %v959 = vsel %vm958, %v956, 0.0
    %960 = vadd.xlane.f32.xlu0 %v959
    %v961 = vpop.xlane.xlu0 %960
    %v962 = vmul.f32 %v476, %v952
    %964 = vrot.lane.b32.xlu0 %v962, 32
    %v965 = vpop.permute.xlu0 %964
    %v967 = vsel %vm958, %v965, 0.0
    %968 = vadd.xlane.f32.xlu0 %v967
    %v969 = vpop.xlane.xlu0 %968
    %v970 = vmul.f32 %v651, %v952
    %972 = vrot.lane.b32.xlu0 %v970, 32
    %v973 = vpop.permute.xlu0 %972
    %v975 = vsel %vm958, %v973, 0.0
    %976 = vadd.xlane.f32.xlu0 %v975
    %v977 = vpop.xlane.xlu0 %976
    %v978 = vmul.f32 %v826, %v952
    %980 = vrot.lane.b32.xlu0 %v978, 32
    %v981 = vpop.permute.xlu0 %980
    %v983 = vsel %vm958, %v981, 0.0
    %984 = vadd.xlane.f32.xlu0 %v983
    %v985 = vpop.xlane.xlu0 %984
    %vm986 = vcmask 7168
    %v987 = vsel %vm986, %v961, %v969
    %vm988 = vcmask 15360
    %v989 = vsel %vm988, %v987, %v977
    %vm990 = vcmask 23552
    %v991 = vsel %vm990, %v989, %v985
    %vm992 = vcmask 27648
    %v993 = vsel %vm992, %v991, -inf
    %994 = vmax.xlane.f32.xlu0 %v993
    %v995 = vpop.xlane.xlu0 %994
    %v996 = vsub.f32 %v991, %v995
    %v997 = vmul.f32 %v996, 1.442695
    %v998 = vpow.pop %v997
    %v999 = vsel %vm992, %v998, 0.0
    %1000 = vadd.xlane.f32.xlu0 %v999
    %v1001 = vpop.xlane.xlu0 %1000
    %v1002 = vrcp.pop %v1001
    %v1003 = vmul.f32 %v998, %v1002
    %1005 = vset.pattern.permute.xlu0 0
    %1006 = vperm.xlu0 %1005, %v1003
    %v1007 = vpop.permute.xlu0 %1006
    %v1009 = vmul.f32 %v1007, %v301
    %v1010 = vadd.f32 %v1009, 0.0
    %1011 = vset.pattern.permute.xlu0 1
    %1012 = vperm.xlu0 %1011, %v1003
    %v1013 = vpop.permute.xlu0 %1012
    %v1015 = vmul.f32 %v1013, %v476
    %v1016 = vadd.f32 %v1010, %v1015
    %1017 = vset.pattern.permute.xlu0 2
    %1018 = vperm.xlu0 %1017, %v1003
    %v1019 = vpop.permute.xlu0 %1018
    %v1021 = vmul.f32 %v1019, %v651
    %v1022 = vadd.f32 %v1016, %v1021
    %1023 = vset.pattern.permute.xlu0 3
    %1024 = vperm.xlu0 %1023, %v1003
    %v1025 = vpop.permute.xlu0 %1024
    %v1027 = vmul.f32 %v1025, %v826
    %v1028 = vadd.f32 %v1022, %v1027
    %v1029 = vld [vmem:[#allocation8] sm:$0xff]
    %v1030 = vld [vmem:[#allocation8 + $0x8] sm:$0xff]
    %v1031 = vld [vmem:[#allocation8 + $0x10] sm:$0xff]
    %v1032 = vld [vmem:[#allocation8 + $0x18] sm:$0xff]
    %s1033 = scalar_lea.vmem [#allocation8], 32
    %v1034 = vld [vmem:[%s1033] sm:$0xff]
    %v1035 = vld [vmem:[%s1033 + $0x8] sm:$0xff]
    %v1036 = vld [vmem:[%s1033 + $0x10] sm:$0xff]
    %v1037 = vld [vmem:[%s1033 + $0x18] sm:$0xff]
    %1039 = vrot.lane.b32.xlu0 %v952, 32
    %v1040 = vpop.permute.xlu0 %1039
    %v1041 = vsel %vm119, %v1040, 0
    %1043 = vmatprep.subr.mxu0 0.0
    %1044 = vmatpush1.msra.mxu0 0.0
    %1045 = vmatprep.subr.mxu0 0.0
    %1046 = vmatpush1.msra.mxu0 0.0
    %1047 = vmatprep.subr.mxu0 0.0
    %1048 = vmatpush1.msra.mxu0 0.0
    %1049 = vmatprep.subr.mxu0 0.0
    %1050 = vmatpush1.msra.mxu0 0.0
    %1051 = vmatprep.subr.mxu0 0.0
    %1052 = vmatpush1.msra.mxu0 0.0
    %1053 = vmatprep.subr.mxu0 0.0
    %1054 = vmatpush1.msra.mxu0 0.0
    %1055 = vmatprep.subr.mxu0 0.0
    %1056 = vmatpush1.msra.mxu0 0.0
    %1057 = vmatprep.subr.mxu0 0.0
    %1058 = vmatpush1.msra.mxu0 0.0
    %1059 = vmatprep.subr.mxu0 0.0
    %1060 = vmatpush1.msra.mxu0 0.0
    %1061 = vmatprep.subr.mxu0 0.0
    %1062 = vmatpush1.msra.mxu0 0.0
    %1063 = vmatprep.subr.mxu0 0.0
    %1064 = vmatpush1.msra.mxu0 0.0
    %1065 = vmatprep.subr.mxu0 0.0
    %1066 = vmatpush1.msra.mxu0 0.0
    %1067 = vmatprep.subr.mxu0 0.0
    %1068 = vmatpush1.msra.mxu0 %v1037
    %1069 = vmatprep.subr.mxu0 0.0
    %1070 = vmatpush1.msra.mxu0 %v1036
    %1071 = vmatprep.subr.mxu0 0.0
    %1072 = vmatpush1.msra.mxu0 %v1035
    %1073 = vmatprep.subr.mxu0 0.0
    %1074 = vmatpush1.msra.mxu0 %v1034
    %1075 = vmatprep.subr.mxu0 0.0
    %1076 = vmatpush2.msra.mxu0 0.0
    %1077 = vmatprep.subr.mxu0 0.0
    %1078 = vmatpush2.msra.mxu0 0.0
    %1079 = vmatprep.subr.mxu0 0.0
    %1080 = vmatpush2.msra.mxu0 0.0
    %1081 = vmatprep.subr.mxu0 0.0
    %1082 = vmatpush2.msra.mxu0 0.0
    %1083 = vmatprep.subr.mxu0 0.0
    %1084 = vmatpush2.msra.mxu0 0.0
    %1085 = vmatprep.subr.mxu0 0.0
    %1086 = vmatpush2.msra.mxu0 0.0
    %1087 = vmatprep.subr.mxu0 0.0
    %1088 = vmatpush2.msra.mxu0 0.0
    %1089 = vmatprep.subr.mxu0 0.0
    %1090 = vmatpush2.msra.mxu0 0.0
    %1091 = vmatprep.subr.mxu0 0.0
    %1092 = vmatpush2.msra.mxu0 0.0
    %1093 = vmatprep.subr.mxu0 0.0
    %1094 = vmatpush2.msra.mxu0 0.0
    %1095 = vmatprep.subr.mxu0 0.0
    %1096 = vmatpush2.msra.mxu0 0.0
    %1097 = vmatprep.subr.mxu0 0.0
    %1098 = vmatpush2.msra.mxu0 0.0
    %1099 = vmatprep.subr.mxu0 0.0
    %1100 = vmatpush2.msra.mxu0 0.0
    %1101 = vmatprep.subr.mxu0 0.0
    %1102 = vmatpush2.msra.mxu0 0.0
    %1103 = vmatprep.subr.mxu0 0.0
    %1104 = vmatpush2.msra.mxu0 0.0
    %1105 = vmatprep.subr.mxu0 0.0
    %1106 = vmatpush2.msra.mxu0 0.0
    %1107 = vmatprep.mubr.f32.mxu0 0.0
    %1108 = vmatmul.mubr.f32.gmra.mxu0 %v1041
    %v1109 = vpop.f32.mrf.mxu0
    %v1110 = vadd.f32 0.0, %v1109
    %v1111 = vpop.f32.mrf.mxu0
    %1112 = vdwg.mxu0
    %1114 = vrot.lane.b32.xlu0 %v1028, 32
    %v1115 = vpop.permute.xlu0 %1114
    %v1116 = vsel %vm119, %v1115, 0
    %1118 = vmatprep.subr.mxu0 0.0
    %1119 = vmatpush1.msra.mxu0 0.0
    %1120 = vmatprep.subr.mxu0 0.0
    %1121 = vmatpush1.msra.mxu0 0.0
    %1122 = vmatprep.subr.mxu0 0.0
    %1123 = vmatpush1.msra.mxu0 0.0
    %1124 = vmatprep.subr.mxu0 0.0
    %1125 = vmatpush1.msra.mxu0 0.0
    %1126 = vmatprep.subr.mxu0 0.0
    %1127 = vmatpush1.msra.mxu0 0.0
    %1128 = vmatprep.subr.mxu0 0.0
    %1129 = vmatpush1.msra.mxu0 0.0
    %1130 = vmatprep.subr.mxu0 0.0
    %1131 = vmatpush1.msra.mxu0 0.0
    %1132 = vmatprep.subr.mxu0 0.0
    %1133 = vmatpush1.msra.mxu0 0.0
    %1134 = vmatprep.subr.mxu0 0.0
    %1135 = vmatpush1.msra.mxu0 0.0
    %1136 = vmatprep.subr.mxu0 0.0
    %1137 = vmatpush1.msra.mxu0 0.0
    %1138 = vmatprep.subr.mxu0 0.0
    %1139 = vmatpush1.msra.mxu0 0.0
    %1140 = vmatprep.subr.mxu0 0.0
    %1141 = vmatpush1.msra.mxu0 0.0
    %1142 = vmatprep.subr.mxu0 0.0
    %1143 = vmatpush1.msra.mxu0 %v1032
    %1144 = vmatprep.subr.mxu0 0.0
    %1145 = vmatpush1.msra.mxu0 %v1031
    %1146 = vmatprep.subr.mxu0 0.0
    %1147 = vmatpush1.msra.mxu0 %v1030
    %1148 = vmatprep.subr.mxu0 0.0
    %1149 = vmatpush1.msra.mxu0 %v1029
    %1150 = vmatprep.subr.mxu0 0.0
    %1151 = vmatpush2.msra.mxu0 0.0
    %1152 = vmatprep.subr.mxu0 0.0
    %1153 = vmatpush2.msra.mxu0 0.0
    %1154 = vmatprep.subr.mxu0 0.0
    %1155 = vmatpush2.msra.mxu0 0.0
    %1156 = vmatprep.subr.mxu0 0.0
    %1157 = vmatpush2.msra.mxu0 0.0
    %1158 = vmatprep.subr.mxu0 0.0
    %1159 = vmatpush2.msra.mxu0 0.0
    %1160 = vmatprep.subr.mxu0 0.0
    %1161 = vmatpush2.msra.mxu0 0.0
    %1162 = vmatprep.subr.mxu0 0.0
    %1163 = vmatpush2.msra.mxu0 0.0
    %1164 = vmatprep.subr.mxu0 0.0
    %1165 = vmatpush2.msra.mxu0 0.0
    %1166 = vmatprep.subr.mxu0 0.0
    %1167 = vmatpush2.msra.mxu0 0.0
    %1168 = vmatprep.subr.mxu0 0.0
    %1169 = vmatpush2.msra.mxu0 0.0
    %1170 = vmatprep.subr.mxu0 0.0
    %1171 = vmatpush2.msra.mxu0 0.0
    %1172 = vmatprep.subr.mxu0 0.0
    %1173 = vmatpush2.msra.mxu0 0.0
    %1174 = vmatprep.subr.mxu0 0.0
    %1175 = vmatpush2.msra.mxu0 0.0
    %1176 = vmatprep.subr.mxu0 0.0
    %1177 = vmatpush2.msra.mxu0 0.0
    %1178 = vmatprep.subr.mxu0 0.0
    %1179 = vmatpush2.msra.mxu0 0.0
    %1180 = vmatprep.subr.mxu0 0.0
    %1181 = vmatpush2.msra.mxu0 0.0
    %1182 = vmatprep.mubr.f32.mxu0 0.0
    %1183 = vmatmul.mubr.f32.gmra.mxu0 %v1116
    %v1184 = vpop.f32.mrf.mxu0
    %v1185 = vadd.f32 %v1110, %v1184
    %v1186 = vpop.f32.mrf.mxu0
    %1187 = vdwg.mxu0
    %v1188 = vld [vmem:[%s9] sm:$0x1]
    %v1190 = vlaneseq
    %v1191 = vshrl.u32 %v1190, 7
    %v1192 = vsub.s32 0, %v1191
    %v1193 = vrot.slane %v1188, %v1192
    %v1195 = vadd.f32 %v1185, %v1193
    %v1196 = vtanh.pop %v1195
    %v1197 = vld [vmem:[%s10] sm:$0xff]
    %v1198 = vld [vmem:[%s10 + $0x8] sm:$0xff]
    %v1199 = vld [vmem:[%s10 + $0x10] sm:$0xff]
    %v1200 = vld [vmem:[%s10 + $0x18] sm:$0xff]
    %v1201 = vld [vmem:[#allocation2] sm:$0x1]
    %v1203 = vlaneseq
    %v1204 = vshrl.u32 %v1203, 7
    %v1205 = vsub.s32 0, %v1204
    %v1206 = vrot.slane %v1201, %v1205
    %v1209 = vsel %vm119, %v1196, 0
    %1211 = vmatprep.subr.mxu0 0.0
    %1212 = vmatpush1.msra.mxu0 0.0
    %1213 = vmatprep.subr.mxu0 0.0
    %1214 = vmatpush1.msra.mxu0 0.0
    %1215 = vmatprep.subr.mxu0 0.0
    %1216 = vmatpush1.msra.mxu0 0.0
    %1217 = vmatprep.subr.mxu0 0.0
    %1218 = vmatpush1.msra.mxu0 0.0
    %1219 = vmatprep.subr.mxu0 0.0
    %1220 = vmatpush1.msra.mxu0 0.0
    %1221 = vmatprep.subr.mxu0 0.0
    %1222 = vmatpush1.msra.mxu0 0.0
    %1223 = vmatprep.subr.mxu0 0.0
    %1224 = vmatpush1.msra.mxu0 0.0
    %1225 = vmatprep.subr.mxu0 0.0
    %1226 = vmatpush1.msra.mxu0 0.0
    %1227 = vmatprep.subr.mxu0 0.0
    %1228 = vmatpush1.msra.mxu0 0.0
    %1229 = vmatprep.subr.mxu0 0.0
    %1230 = vmatpush1.msra.mxu0 0.0
    %1231 = vmatprep.subr.mxu0 0.0
    %1232 = vmatpush1.msra.mxu0 0.0
    %1233 = vmatprep.subr.mxu0 0.0
    %1234 = vmatpush1.msra.mxu0 0.0
    %1235 = vmatprep.subr.mxu0 0.0
    %1236 = vmatpush1.msra.mxu0 %v1200
    %1237 = vmatprep.subr.mxu0 0.0
    %1238 = vmatpush1.msra.mxu0 %v1199
    %1239 = vmatprep.subr.mxu0 0.0
    %1240 = vmatpush1.msra.mxu0 %v1198
    %1241 = vmatprep.subr.mxu0 0.0
    %1242 = vmatpush1.msra.mxu0 %v1197
    %1243 = vmatprep.subr.mxu0 0.0
    %1244 = vmatpush2.msra.mxu0 0.0
    %1245 = vmatprep.subr.mxu0 0.0
    %1246 = vmatpush2.msra.mxu0 0.0
    %1247 = vmatprep.subr.mxu0 0.0
    %1248 = vmatpush2.msra.mxu0 0.0
    %1249 = vmatprep.subr.mxu0 0.0
    %1250 = vmatpush2.msra.mxu0 0.0
    %1251 = vmatprep.subr.mxu0 0.0
    %1252 = vmatpush2.msra.mxu0 0.0
    %1253 = vmatprep.subr.mxu0 0.0
    %1254 = vmatpush2.msra.mxu0 0.0
    %1255 = vmatprep.subr.mxu0 0.0
    %1256 = vmatpush2.msra.mxu0 0.0
    %1257 = vmatprep.subr.mxu0 0.0
    %1258 = vmatpush2.msra.mxu0 0.0
    %1259 = vmatprep.subr.mxu0 0.0
    %1260 = vmatpush2.msra.mxu0 0.0
    %1261 = vmatprep.subr.mxu0 0.0
    %1262 = vmatpush2.msra.mxu0 0.0
    %1263 = vmatprep.subr.mxu0 0.0
    %1264 = vmatpush2.msra.mxu0 0.0
    %1265 = vmatprep.subr.mxu0 0.0
    %1266 = vmatpush2.msra.mxu0 0.0
    %1267 = vmatprep.subr.mxu0 0.0
    %1268 = vmatpush2.msra.mxu0 0.0
    %1269 = vmatprep.subr.mxu0 0.0
    %1270 = vmatpush2.msra.mxu0 0.0
    %1271 = vmatprep.subr.mxu0 0.0
    %1272 = vmatpush2.msra.mxu0 0.0
    %1273 = vmatprep.subr.mxu0 0.0
    %1274 = vmatpush2.msra.mxu0 0.0
    %1275 = vmatprep.mubr.f32.mxu0 0.0
    %1276 = vmatmul.mubr.f32.gmra.mxu0 %v1209
    %v1277 = vpop.f32.mrf.mxu0
    %v1278 = vadd.f32 %v1206, %v1277
    %v1279 = vpop.f32.mrf.mxu0
    %1280 = vdwg.mxu0
    %vm1281 = vcmask 3072
    %1282 = vst.msk [vmem:[%s13] sm:$0xf] %vm1281, %v1278
    %v1283 = vsub.f32 %v1278, %v1278
    %v1284 = vmul.f32 %v1283, 1.442695
    %v1285 = vpow.pop %v1284
    %v1286 = vadd.f32 %v1285, 0.0
    %v1287 = vlog2.pop %v1286
    %v1288 = vmul.f32 %v1287, 0.6931472
    %v1289 = vadd.f32 %v1278, %v1288
    %v1290 = vsub.f32 %v1278, %v1289
    %1291 = vst.msk [vmem:[%s12] sm:$0xf] %vm1281, %v1290
    // Predicated region
    $region66: #{tpu_custom_call.1} parent=1 // pred_check
      _
    $region67: #{tpu_custom_call.1} parent=1 // pred_check_branch
      %1293 = sbr.rel (0) target = $region69
    $region68: #{tpu_custom_call.1} parent=1 // pred_region
      _
    $region69: #{tpu_custom_call.1} parent=1 // pred_fallthru
      _
    // Predicated region
    $region70: #{tpu_custom_call.1} parent=1 // pred_check
      _
    $region71: #{tpu_custom_call.1} parent=1 // pred_check_branch
      %1295 = sbr.rel (0) target = $region73
    $region72: #{tpu_custom_call.1} parent=1 // pred_region
      _
    $region73: #{tpu_custom_call.1} parent=1 // pred_fallthru
      _
    // Predicated region
    $region74: #{tpu_custom_call.1} parent=1 // pred_check
      _
    $region75: #{tpu_custom_call.1} parent=1 // pred_check_branch
      %1297 = sbr.rel (0) target = $region77
    $region76: #{tpu_custom_call.1} parent=1 // pred_region
      _
    $region77: #{tpu_custom_call.1} parent=1 // pred_fallthru
      _
    // Predicated region
    $region78: #{tpu_custom_call.1} parent=1 // pred_check
      _
    $region79: #{tpu_custom_call.1} parent=1 // pred_check_branch
      %1299 = sbr.rel (0) target = $region81
    $region80: #{tpu_custom_call.1} parent=1 // pred_region
      _
    $region81: #{tpu_custom_call.1} parent=1 // pred_fallthru
      _
    %1300 = vsyncpa [#allocation4], 1
    %1301 = vsyncpa [#allocation6], 1
    %1302 = vsyncpa [#allocation9], 1

</llo_original>
